<compile_context>
chip_gen: v6e
topology: v6e:2x2x1
jax: 0.10.0
libtpu: 0.0.40
codegen_flags: <defaults>
</compile_context>

<pallas_src>
import functools

import jax
import jax.numpy as jnp
import numpy as np
from jax.experimental import pallas as pl
from jax.experimental.pallas import tpu as pltpu

Cin = 16
Cout = 4
KH = KW = 3


def conv_logsoftmax_kernel(x_ref, w_ref, b_ref, o_ref, *, row_stride):
    """3x3 valid conv (9 rolled taps) + bias + log_softmax over Cout.

    x_ref: (N, Cin, HW)        flattened images, HW = H*W on the lane axis
    w_ref: (KH*KW, Cout, Cin)  per-tap weight slices
    b_ref: (Cout, 1)           bias
    o_ref: (N, Cout, HW)       log-probs on the full (wrapped) HxW grid; only
                               the valid (H-2)x(W-2) window is meaningful.
    """
    n_batch, _, hw = x_ref.shape
    total = n_batch * hw

    # Fuse the batch along the lane axis: (Cin, N*HW) = (16, 512). The concat
    # boundary (multiple of 256 lanes) is 128-aligned -> clean VMEM copy.
    rhs = jnp.concatenate([x_ref[n] for n in range(n_batch)], axis=-1)

    # 3x3 valid conv as 9 accumulated (Cout, Cin) @ (Cin, N*HW) dots. Each tap
    # is a left-shift of the flattened spatial axis by kh*W + kw, done with an
    # XLU lane rotation (free slot next to the MXU/VPU). Wrap-around only
    # pollutes positions with oh >= Ho or ow >= Wo (and the image/batch seam
    # positions are a subset of those), which the wrapper slices off.
    acc = jnp.zeros((Cout, total), jnp.float32)
    for kh in range(KH):
        for kw in range(KW):
            d = kh * row_stride + kw           # left shift for this tap
            shifted = rhs if d == 0 else pltpu.roll(rhs, shift=total - d, axis=1)
            acc = acc + jnp.dot(w_ref[kh * KW + kw], shifted,
                                preferred_element_type=jnp.float32)
    acc = acc + b_ref[...]                     # bias, broadcast along lanes

    # log_softmax over Cout (axis 0 = 4 sublanes): tiny sublane reduction;
    # exp/log ride the EUP slot.
    m = jnp.max(acc, axis=0, keepdims=True)                  # (1, N*HW)
    s = acc - m
    lse = jnp.log(jnp.sum(jnp.exp(s), axis=0, keepdims=True))
    logp = (s - lse).astype(o_ref.dtype)                     # (Cout, N*HW)

    # Lane-dense stores: each image is a full 256-lane (2-vreg-wide) slab.
    for n in range(n_batch):
        o_ref[n] = logp[:, n * hw:(n + 1) * hw]


@jax.jit
def net_forward(x_nchw, w_oihw, b):
    """Equivalent of Net.forward: conv1(x) then log_softmax(dim=1)."""
    N, _, H, W = x_nchw.shape
    Ho, Wo = H - KH + 1, W - KW + 1
    HW = H * W

    # Wrapper-side prep is tiny: a free reshape of x, a 2.3 KiB weight
    # transpose, and a free bias reshape. No im2col slab in HBM.
    x_flat = x_nchw.reshape(N, Cin, HW)                               # free
    w_taps = jnp.transpose(w_oihw, (2, 3, 0, 1)).reshape(KH * KW, Cout, Cin)
    b2 = b.reshape(Cout, 1)

    io_bytes = 4 * (x_flat.size + w_taps.size + b2.size + N * Cout * HW)
    out = pl.pallas_call(
        functools.partial(conv_logsoftmax_kernel, row_stride=W),
        out_shape=jax.ShapeDtypeStruct((N, Cout, HW), x_nchw.dtype),
        in_specs=[
            pl.BlockSpec(memory_space=pltpu.MemorySpace.VMEM),
            pl.BlockSpec(memory_space=pltpu.MemorySpace.VMEM),
            pl.BlockSpec(memory_space=pltpu.MemorySpace.VMEM),
        ],
        out_specs=pl.BlockSpec(memory_space=pltpu.MemorySpace.VMEM),
        cost_estimate=pl.CostEstimate(
            flops=2 * N * Cout * Cin * KH * KW * Ho * Wo,
            transcendentals=N * HW * (Cout + 1),
            bytes_accessed=io_bytes,
        ),
        # NOTE: grid-less on purpose — the ~70 KiB working set fits VMEM on
        # every generation (v7x: 64 MiB physical / 32 MiB scoped). If N/H/W
        # ever grow, add a batch/spatial grid with
        # dimension_semantics=("parallel",) and re-derive the tile size for
        # v7x separately from v5e/v6e.
    )(x_flat, w_taps, b2)

    # Free reshape + tiny slice: drop the wrap-around border of the rolled conv.
    return out.reshape(N, Cout, H, W)[:, :, :Ho, :Wo]


def reference_forward(x_nchw, w_oihw, b):
    out = jax.lax.conv_general_dilated(
        x_nchw, w_oihw, window_strides=(1, 1), padding="VALID",
        dimension_numbers=("NCHW", "OIHW", "NCHW"))
    out = out + b.reshape(1, Cout, 1, 1)
    return jax.nn.log_softmax(out, axis=1)


if __name__ == "__main__":
    key = jax.random.PRNGKey(0)
    kx, kw, kb = jax.random.split(key, 3)

    # Deterministic parameter init mimicking nn.Conv2d default:
    # uniform(-1/sqrt(fan_in), 1/sqrt(fan_in)), fan_in = Cin*KH*KW.
    fan_in = Cin * KH * KW
    bound = 1.0 / np.sqrt(fan_in)
    w_oihw = jax.random.uniform(kw, (Cout, Cin, KH, KW), jnp.float32,
                                minval=-bound, maxval=bound)
    b = jax.random.uniform(kb, (Cout,), jnp.float32,
                           minval=-bound, maxval=bound)

    # Small input consistent with Conv2d(16, 4, (3,3)): N=2, Cin=16, 16x16.
    x = jax.random.normal(kx, (2, Cin, 16, 16), dtype=jnp.float32)

    out = net_forward(x, w_oihw, b)
    out = jax.block_until_ready(out)

    ref = reference_forward(x, w_oihw, b)
    assert out.shape == (2, Cout, 14, 14)
    np.testing.assert_allclose(np.asarray(out), np.asarray(ref),
                               rtol=1e-5, atol=1e-5)

    print("KERNEL_OK")
</pallas_src>

<mosaic_0001>
module attributes {stable_mosaic.version = 11 : i64} {
  func.func @conv_logsoftmax_kernel(%arg0: memref<2x16x256xf32, #tpu.memory_space<vmem>>, %arg1: memref<9x4x16xf32, #tpu.memory_space<vmem>>, %arg2: memref<4x1xf32, #tpu.memory_space<vmem>>, %arg3: memref<2x4x256xf32, #tpu.memory_space<vmem>>) attributes {dimension_semantics = [], scalar_prefetch = 0 : i64, scratch_operands = 0 : i64, tpu.core_type = #tpu.core_type<tc>} {
    %c0 = arith.constant 0 : index
    %c0_0 = arith.constant 0 : index
    %c0_1 = arith.constant 0 : index
    %0 = vector.load %arg0[%c0, %c0_0, %c0_1] : memref<2x16x256xf32, #tpu.memory_space<vmem>>, vector<1x16x256xf32>
    %1 = vector.shape_cast %0 : vector<1x16x256xf32> to vector<16x256xf32>
    %c1 = arith.constant 1 : index
    %c0_2 = arith.constant 0 : index
    %c0_3 = arith.constant 0 : index
    %2 = vector.load %arg0[%c1, %c0_2, %c0_3] : memref<2x16x256xf32, #tpu.memory_space<vmem>>, vector<1x16x256xf32>
    %3 = vector.shape_cast %2 : vector<1x16x256xf32> to vector<16x256xf32>
    %4 = tpu.concatenate %1, %3 in 1 : vector<16x256xf32>, vector<16x256xf32> -> vector<16x512xf32>
    %cst = arith.constant 0.000000e+00 : f32
    %5 = vector.broadcast %cst : f32 to vector<4x512xf32>
    %c0_4 = arith.constant 0 : index
    %c0_5 = arith.constant 0 : index
    %c0_6 = arith.constant 0 : index
    %6 = vector.load %arg1[%c0_4, %c0_5, %c0_6] : memref<9x4x16xf32, #tpu.memory_space<vmem>>, vector<1x4x16xf32>
    %7 = vector.shape_cast %6 : vector<1x4x16xf32> to vector<4x16xf32>
    %cst_7 = arith.constant dense<0.000000e+00> : vector<4x512xf32>
    %8 = tpu.matmul %7, %4, %cst_7 {dimension_numbers = #tpu.dot_dimension_numbers<[1], [0], [0], [1], [0, 0, 1, 1], [], []>} : vector<4x16xf32>, vector<16x512xf32>, vector<4x512xf32> -> vector<4x512xf32>
    %9 = arith.addf %5, %8 : vector<4x512xf32>
    %c511_i32 = arith.constant 511 : i32
    %10 = tpu.dynamic_rotate %4 by %c511_i32 dim 1 : vector<16x512xf32>, i32 -> vector<16x512xf32>
    %c1_8 = arith.constant 1 : index
    %c0_9 = arith.constant 0 : index
    %c0_10 = arith.constant 0 : index
    %11 = vector.load %arg1[%c1_8, %c0_9, %c0_10] : memref<9x4x16xf32, #tpu.memory_space<vmem>>, vector<1x4x16xf32>
    %12 = vector.shape_cast %11 : vector<1x4x16xf32> to vector<4x16xf32>
    %cst_11 = arith.constant dense<0.000000e+00> : vector<4x512xf32>
    %13 = tpu.matmul %12, %10, %cst_11 {dimension_numbers = #tpu.dot_dimension_numbers<[1], [0], [0], [1], [0, 0, 1, 1], [], []>} : vector<4x16xf32>, vector<16x512xf32>, vector<4x512xf32> -> vector<4x512xf32>
    %14 = arith.addf %9, %13 : vector<4x512xf32>
    %c510_i32 = arith.constant 510 : i32
    %15 = tpu.dynamic_rotate %4 by %c510_i32 dim 1 : vector<16x512xf32>, i32 -> vector<16x512xf32>
    %c2 = arith.constant 2 : index
    %c0_12 = arith.constant 0 : index
    %c0_13 = arith.constant 0 : index
    %16 = vector.load %arg1[%c2, %c0_12, %c0_13] : memref<9x4x16xf32, #tpu.memory_space<vmem>>, vector<1x4x16xf32>
    %17 = vector.shape_cast %16 : vector<1x4x16xf32> to vector<4x16xf32>
    %cst_14 = arith.constant dense<0.000000e+00> : vector<4x512xf32>
    %18 = tpu.matmul %17, %15, %cst_14 {dimension_numbers = #tpu.dot_dimension_numbers<[1], [0], [0], [1], [0, 0, 1, 1], [], []>} : vector<4x16xf32>, vector<16x512xf32>, vector<4x512xf32> -> vector<4x512xf32>
    %19 = arith.addf %14, %18 : vector<4x512xf32>
    %c496_i32 = arith.constant 496 : i32
    %20 = tpu.dynamic_rotate %4 by %c496_i32 dim 1 : vector<16x512xf32>, i32 -> vector<16x512xf32>
    %c3 = arith.constant 3 : index
    %c0_15 = arith.constant 0 : index
    %c0_16 = arith.constant 0 : index
    %21 = vector.load %arg1[%c3, %c0_15, %c0_16] : memref<9x4x16xf32, #tpu.memory_space<vmem>>, vector<1x4x16xf32>
    %22 = vector.shape_cast %21 : vector<1x4x16xf32> to vector<4x16xf32>
    %cst_17 = arith.constant dense<0.000000e+00> : vector<4x512xf32>
    %23 = tpu.matmul %22, %20, %cst_17 {dimension_numbers = #tpu.dot_dimension_numbers<[1], [0], [0], [1], [0, 0, 1, 1], [], []>} : vector<4x16xf32>, vector<16x512xf32>, vector<4x512xf32> -> vector<4x512xf32>
    %24 = arith.addf %19, %23 : vector<4x512xf32>
    %c495_i32 = arith.constant 495 : i32
    %25 = tpu.dynamic_rotate %4 by %c495_i32 dim 1 : vector<16x512xf32>, i32 -> vector<16x512xf32>
    %c4 = arith.constant 4 : index
    %c0_18 = arith.constant 0 : index
    %c0_19 = arith.constant 0 : index
    %26 = vector.load %arg1[%c4, %c0_18, %c0_19] : memref<9x4x16xf32, #tpu.memory_space<vmem>>, vector<1x4x16xf32>
    %27 = vector.shape_cast %26 : vector<1x4x16xf32> to vector<4x16xf32>
    %cst_20 = arith.constant dense<0.000000e+00> : vector<4x512xf32>
    %28 = tpu.matmul %27, %25, %cst_20 {dimension_numbers = #tpu.dot_dimension_numbers<[1], [0], [0], [1], [0, 0, 1, 1], [], []>} : vector<4x16xf32>, vector<16x512xf32>, vector<4x512xf32> -> vector<4x512xf32>
    %29 = arith.addf %24, %28 : vector<4x512xf32>
    %c494_i32 = arith.constant 494 : i32
    %30 = tpu.dynamic_rotate %4 by %c494_i32 dim 1 : vector<16x512xf32>, i32 -> vector<16x512xf32>
    %c5 = arith.constant 5 : index
    %c0_21 = arith.constant 0 : index
    %c0_22 = arith.constant 0 : index
    %31 = vector.load %arg1[%c5, %c0_21, %c0_22] : memref<9x4x16xf32, #tpu.memory_space<vmem>>, vector<1x4x16xf32>
    %32 = vector.shape_cast %31 : vector<1x4x16xf32> to vector<4x16xf32>
    %cst_23 = arith.constant dense<0.000000e+00> : vector<4x512xf32>
    %33 = tpu.matmul %32, %30, %cst_23 {dimension_numbers = #tpu.dot_dimension_numbers<[1], [0], [0], [1], [0, 0, 1, 1], [], []>} : vector<4x16xf32>, vector<16x512xf32>, vector<4x512xf32> -> vector<4x512xf32>
    %34 = arith.addf %29, %33 : vector<4x512xf32>
    %c480_i32 = arith.constant 480 : i32
    %35 = tpu.dynamic_rotate %4 by %c480_i32 dim 1 : vector<16x512xf32>, i32 -> vector<16x512xf32>
    %c6 = arith.constant 6 : index
    %c0_24 = arith.constant 0 : index
    %c0_25 = arith.constant 0 : index
    %36 = vector.load %arg1[%c6, %c0_24, %c0_25] : memref<9x4x16xf32, #tpu.memory_space<vmem>>, vector<1x4x16xf32>
    %37 = vector.shape_cast %36 : vector<1x4x16xf32> to vector<4x16xf32>
    %cst_26 = arith.constant dense<0.000000e+00> : vector<4x512xf32>
    %38 = tpu.matmul %37, %35, %cst_26 {dimension_numbers = #tpu.dot_dimension_numbers<[1], [0], [0], [1], [0, 0, 1, 1], [], []>} : vector<4x16xf32>, vector<16x512xf32>, vector<4x512xf32> -> vector<4x512xf32>
    %39 = arith.addf %34, %38 : vector<4x512xf32>
    %c479_i32 = arith.constant 479 : i32
    %40 = tpu.dynamic_rotate %4 by %c479_i32 dim 1 : vector<16x512xf32>, i32 -> vector<16x512xf32>
    %c7 = arith.constant 7 : index
    %c0_27 = arith.constant 0 : index
    %c0_28 = arith.constant 0 : index
    %41 = vector.load %arg1[%c7, %c0_27, %c0_28] : memref<9x4x16xf32, #tpu.memory_space<vmem>>, vector<1x4x16xf32>
    %42 = vector.shape_cast %41 : vector<1x4x16xf32> to vector<4x16xf32>
    %cst_29 = arith.constant dense<0.000000e+00> : vector<4x512xf32>
    %43 = tpu.matmul %42, %40, %cst_29 {dimension_numbers = #tpu.dot_dimension_numbers<[1], [0], [0], [1], [0, 0, 1, 1], [], []>} : vector<4x16xf32>, vector<16x512xf32>, vector<4x512xf32> -> vector<4x512xf32>
    %44 = arith.addf %39, %43 : vector<4x512xf32>
    %c478_i32 = arith.constant 478 : i32
    %45 = tpu.dynamic_rotate %4 by %c478_i32 dim 1 : vector<16x512xf32>, i32 -> vector<16x512xf32>
    %c8 = arith.constant 8 : index
    %c0_30 = arith.constant 0 : index
    %c0_31 = arith.constant 0 : index
    %46 = vector.load %arg1[%c8, %c0_30, %c0_31] : memref<9x4x16xf32, #tpu.memory_space<vmem>>, vector<1x4x16xf32>
    %47 = vector.shape_cast %46 : vector<1x4x16xf32> to vector<4x16xf32>
    %cst_32 = arith.constant dense<0.000000e+00> : vector<4x512xf32>
    %48 = tpu.matmul %47, %45, %cst_32 {dimension_numbers = #tpu.dot_dimension_numbers<[1], [0], [0], [1], [0, 0, 1, 1], [], []>} : vector<4x16xf32>, vector<16x512xf32>, vector<4x512xf32> -> vector<4x512xf32>
    %49 = arith.addf %44, %48 : vector<4x512xf32>
    %c0_33 = arith.constant 0 : index
    %c0_34 = arith.constant 0 : index
    %50 = vector.load %arg2[%c0_33, %c0_34] : memref<4x1xf32, #tpu.memory_space<vmem>>, vector<4x1xf32>
    %51 = vector.broadcast %50 : vector<4x1xf32> to vector<4x512xf32>
    %52 = arith.addf %49, %51 : vector<4x512xf32>
    %cst_35 = arith.constant dense<0xFF800000> : vector<512xf32>
    %53 = vector.multi_reduction <maximumf>, %52, %cst_35 [0] : vector<4x512xf32> to vector<512xf32>
    %54 = vector.shape_cast %53 : vector<512xf32> to vector<1x512xf32>
    %55 = vector.broadcast %54 : vector<1x512xf32> to vector<4x512xf32>
    %56 = arith.subf %52, %55 : vector<4x512xf32>
    %57 = math.exp %56 : vector<4x512xf32>
    %cst_36 = arith.constant dense<0.000000e+00> : vector<512xf32>
    %58 = vector.multi_reduction <add>, %57, %cst_36 [0] : vector<4x512xf32> to vector<512xf32>
    %59 = vector.shape_cast %58 : vector<512xf32> to vector<1x512xf32>
    %60 = math.log %59 : vector<1x512xf32>
    %61 = vector.broadcast %60 : vector<1x512xf32> to vector<4x512xf32>
    %62 = arith.subf %56, %61 : vector<4x512xf32>
    %63 = vector.extract_strided_slice %62 {offsets = [0, 0], sizes = [4, 256], strides = [1, 1]} : vector<4x512xf32> to vector<4x256xf32>
    %c0_37 = arith.constant 0 : index
    %c0_38 = arith.constant 0 : index
    %c0_39 = arith.constant 0 : index
    %64 = vector.load %arg3[%c0_37, %c0_38, %c0_39] : memref<2x4x256xf32, #tpu.memory_space<vmem>>, vector<1x4x256xf32>
    %65 = vector.shape_cast %64 : vector<1x4x256xf32> to vector<4x256xf32>
    %66 = vector.shape_cast %63 : vector<4x256xf32> to vector<1x4x256xf32>
    tpu.vector_store %arg3[%c0_37, %c0_38, %c0_39], %66 {strides = array<i32>} : memref<2x4x256xf32, #tpu.memory_space<vmem>>, vector<1x4x256xf32>,
    %67 = vector.extract_strided_slice %62 {offsets = [0, 256], sizes = [4, 256], strides = [1, 1]} : vector<4x512xf32> to vector<4x256xf32>
    %c1_40 = arith.constant 1 : index
    %c0_41 = arith.constant 0 : index
    %c0_42 = arith.constant 0 : index
    %68 = vector.load %arg3[%c1_40, %c0_41, %c0_42] : memref<2x4x256xf32, #tpu.memory_space<vmem>>, vector<1x4x256xf32>
    %69 = vector.shape_cast %68 : vector<1x4x256xf32> to vector<4x256xf32>
    %70 = vector.shape_cast %67 : vector<4x256xf32> to vector<1x4x256xf32>
    tpu.vector_store %arg3[%c1_40, %c0_41, %c0_42], %70 {strides = array<i32>} : memref<2x4x256xf32, #tpu.memory_space<vmem>>, vector<1x4x256xf32>,
    return
  }
}

</mosaic_0001>

<llo_original>
// kernel: net_forward.1
$region0: #{net_forward.1}
  #allocation0 [shape = 'u32[]', space=smem, size = 0x4, offset = 0x4, fixed_abs, tag = 'smem constant byte address 0x4 - core index']
  #allocation1 [shape = 'u32[144,128]{1,0:T(1,128)}', space=vmem, size = 0x12000, scoped, tag = 'internal scratch']
  %s0 = inlined_call_operand.vmem [shape: f32[2,16,256], index: 0, kind: input, shape index: {}]
  %s1 = inlined_call_operand.vmem [shape: f32[9,4,16], index: 1, kind: input, shape index: {}]
  %s2 = inlined_call_operand.vmem [shape: f32[4,1], index: 2, kind: input, shape index: {}]
  %s3 = inlined_call_operand.vmem [shape: f32[2,4,256], index: 3, kind: output, shape index: {}]
  %s4 = sld [smem:[#allocation0]]
  $region22: #{net_forward.1} parent=0
    _
  %s6 = ssub.s32 1, %s4
  %s7 = scalar_select 0, %s6, %s4
  // Predicated region
  $region2: #{net_forward.1} parent=0 // pred_check
    _
  $region3: #{net_forward.1} parent=0 // pred_check_branch
    %9 = sbr.rel (0) target = $region5
  $region4: #{net_forward.1} parent=0 // pred_region
    _
  $region5: #{net_forward.1} parent=0 // pred_fallthru
    _
  // Predicated region
  $region6: #{net_forward.1} parent=0 // pred_check
    _
  $region7: #{net_forward.1} parent=0 // pred_check_branch
    %11 = sbr.rel (0) target = $region9
  $region8: #{net_forward.1} parent=0 // pred_region
    _
  $region9: #{net_forward.1} parent=0 // pred_fallthru
    _
  // Predicated region
  $region10: #{net_forward.1} parent=0 // pred_check
    _
  $region11: #{net_forward.1} parent=0 // pred_check_branch
    %13 = sbr.rel (0) target = $region13
  $region12: #{net_forward.1} parent=0 // pred_region
    _
  $region13: #{net_forward.1} parent=0 // pred_fallthru
    _
  %v14 = vld [vmem:[%s0] sm:$0xff]
  %v15 = vld [vmem:[%s0 + $0x8] sm:$0xff]
  %v16 = vld [vmem:[%s0 + $0x10] sm:$0xff]
  %v17 = vld [vmem:[%s0 + $0x18] sm:$0xff]
  %s18 = scalar_lea.vmem %s0, 32
  %v19 = vld [vmem:[%s18] sm:$0xff]
  %v20 = vld [vmem:[%s18 + $0x8] sm:$0xff]
  %v21 = vld [vmem:[%s18 + $0x10] sm:$0xff]
  %v22 = vld [vmem:[%s18 + $0x18] sm:$0xff]
  %v23 = vld [vmem:[%s1] sm:$0xf]
  %24 = vrot.lane.b32.xlu0 %v14, 127
  %v25 = vpop.permute.xlu0 %24
  %26 = vrot.lane.b32.xlu0 %v16, 127
  %v27 = vpop.permute.xlu0 %26
  %28 = vrot.lane.b32.xlu0 %v15, 127
  %v29 = vpop.permute.xlu0 %28
  %30 = vrot.lane.b32.xlu0 %v17, 127
  %v31 = vpop.permute.xlu0 %30
  %32 = vrot.lane.b32.xlu0 %v19, 127
  %v33 = vpop.permute.xlu0 %32
  %34 = vrot.lane.b32.xlu0 %v21, 127
  %v35 = vpop.permute.xlu0 %34
  %36 = vrot.lane.b32.xlu0 %v20, 127
  %v37 = vpop.permute.xlu0 %36
  %38 = vrot.lane.b32.xlu0 %v22, 127
  %v39 = vpop.permute.xlu0 %38
  %v40 = vlaneseq
  %v41 = vand.u32 %v40, 127
  %vm42 = vcmp.lt.s32.totalorder %v41, 127
  %v43 = vsel %vm42, %v33, %v37
  %v44 = vsel %vm42, %v35, %v39
  %v45 = vsel %vm42, %v29, %v33
  %v46 = vsel %vm42, %v31, %v35
  %v47 = vsel %vm42, %v25, %v29
  %v48 = vsel %vm42, %v27, %v31
  %v49 = vsel %vm42, %v37, %v25
  %v50 = vsel %vm42, %v39, %v27
  %s51 = scalar_lea.vmem %s1, 4
  %v52 = vld [vmem:[%s51] sm:$0xf]
  %vm53 = vcmask 130048
  %v55 = vsel %vm53, %v52, 0
  %57 = vmatprep.subr.mxu0 0.0
  %58 = vmatpush1.msra.mxu0 0.0
  %59 = vmatprep.subr.mxu0 0.0
  %60 = vmatpush1.msra.mxu0 0.0
  %61 = vmatprep.subr.mxu0 0.0
  %62 = vmatpush1.msra.mxu0 0.0
  %63 = vmatprep.subr.mxu0 0.0
  %64 = vmatpush1.msra.mxu0 0.0
  %65 = vmatprep.subr.mxu0 0.0
  %66 = vmatpush1.msra.mxu0 0.0
  %67 = vmatprep.subr.mxu0 0.0
  %68 = vmatpush1.msra.mxu0 0.0
  %69 = vmatprep.subr.mxu0 0.0
  %70 = vmatpush1.msra.mxu0 0.0
  %71 = vmatprep.subr.mxu0 0.0
  %72 = vmatpush1.msra.mxu0 0.0
  %73 = vmatprep.subr.mxu0 0.0
  %74 = vmatpush1.msra.mxu0 0.0
  %75 = vmatprep.subr.mxu0 0.0
  %76 = vmatpush1.msra.mxu0 0.0
  %77 = vmatprep.subr.mxu0 0.0
  %78 = vmatpush1.msra.mxu0 0.0
  %79 = vmatprep.subr.mxu0 0.0
  %80 = vmatpush1.msra.mxu0 0.0
  %81 = vmatprep.subr.mxu0 0.0
  %82 = vmatpush1.msra.mxu0 0.0
  %83 = vmatprep.subr.mxu0 0.0
  %84 = vmatpush1.msra.mxu0 0.0
  %85 = vmatprep.subr.mxu0 %v46
  %86 = vmatpush1.msra.mxu0 %v48
  %87 = vmatprep.subr.mxu0 %v45
  %88 = vmatpush1.msra.mxu0 %v47
  %89 = vmatprep.subr.mxu0 0.0
  %90 = vmatpush2.msra.mxu0 0.0
  %91 = vmatprep.subr.mxu0 0.0
  %92 = vmatpush2.msra.mxu0 0.0
  %93 = vmatprep.subr.mxu0 0.0
  %94 = vmatpush2.msra.mxu0 0.0
  %95 = vmatprep.subr.mxu0 0.0
  %96 = vmatpush2.msra.mxu0 0.0
  %97 = vmatprep.subr.mxu0 0.0
  %98 = vmatpush2.msra.mxu0 0.0
  %99 = vmatprep.subr.mxu0 0.0
  %100 = vmatpush2.msra.mxu0 0.0
  %101 = vmatprep.subr.mxu0 0.0
  %102 = vmatpush2.msra.mxu0 0.0
  %103 = vmatprep.subr.mxu0 0.0
  %104 = vmatpush2.msra.mxu0 0.0
  %105 = vmatprep.subr.mxu0 0.0
  %106 = vmatpush2.msra.mxu0 0.0
  %107 = vmatprep.subr.mxu0 0.0
  %108 = vmatpush2.msra.mxu0 0.0
  %109 = vmatprep.subr.mxu0 0.0
  %110 = vmatpush2.msra.mxu0 0.0
  %111 = vmatprep.subr.mxu0 0.0
  %112 = vmatpush2.msra.mxu0 0.0
  %113 = vmatprep.subr.mxu0 0.0
  %114 = vmatpush2.msra.mxu0 0.0
  %115 = vmatprep.subr.mxu0 0.0
  %116 = vmatpush2.msra.mxu0 0.0
  %117 = vmatprep.subr.mxu0 0.0
  %118 = vmatpush2.msra.mxu0 0.0
  %119 = vmatprep.subr.mxu0 0.0
  %120 = vmatpush2.msra.mxu0 0.0
  %121 = vmatprep.mubr.f32.mxu0 0.0
  %122 = vmatmul.mubr.f32.gmra.mxu0 %v55
  %v123 = vpop.f32.mrf.mxu0
  %v124 = vadd.f32 0.0, %v123
  %v125 = vpop.f32.mrf.mxu0
  %v126 = vadd.f32 0.0, %v125
  %127 = vdwg.mxu0
  %128 = vmatprep.subr.mxu0 0.0
  %129 = vmatpush1.msra.mxu0 0.0
  %130 = vmatprep.subr.mxu0 0.0
  %131 = vmatpush1.msra.mxu0 0.0
  %132 = vmatprep.subr.mxu0 0.0
  %133 = vmatpush1.msra.mxu0 0.0
  %134 = vmatprep.subr.mxu0 0.0
  %135 = vmatpush1.msra.mxu0 0.0
  %136 = vmatprep.subr.mxu0 0.0
  %137 = vmatpush1.msra.mxu0 0.0
  %138 = vmatprep.subr.mxu0 0.0
  %139 = vmatpush1.msra.mxu0 0.0
  %140 = vmatprep.subr.mxu0 0.0
  %141 = vmatpush1.msra.mxu0 0.0
  %142 = vmatprep.subr.mxu0 0.0
  %143 = vmatpush1.msra.mxu0 0.0
  %144 = vmatprep.subr.mxu0 0.0
  %145 = vmatpush1.msra.mxu0 0.0
  %146 = vmatprep.subr.mxu0 0.0
  %147 = vmatpush1.msra.mxu0 0.0
  %148 = vmatprep.subr.mxu0 0.0
  %149 = vmatpush1.msra.mxu0 0.0
  %150 = vmatprep.subr.mxu0 0.0
  %151 = vmatpush1.msra.mxu0 0.0
  %152 = vmatprep.subr.mxu0 0.0
  %153 = vmatpush1.msra.mxu0 0.0
  %154 = vmatprep.subr.mxu0 0.0
  %155 = vmatpush1.msra.mxu0 0.0
  %156 = vmatprep.subr.mxu0 %v50
  %157 = vmatpush1.msra.mxu0 %v44
  %158 = vmatprep.subr.mxu0 %v49
  %159 = vmatpush1.msra.mxu0 %v43
  %160 = vmatprep.subr.mxu0 0.0
  %161 = vmatpush2.msra.mxu0 0.0
  %162 = vmatprep.subr.mxu0 0.0
  %163 = vmatpush2.msra.mxu0 0.0
  %164 = vmatprep.subr.mxu0 0.0
  %165 = vmatpush2.msra.mxu0 0.0
  %166 = vmatprep.subr.mxu0 0.0
  %167 = vmatpush2.msra.mxu0 0.0
  %168 = vmatprep.subr.mxu0 0.0
  %169 = vmatpush2.msra.mxu0 0.0
  %170 = vmatprep.subr.mxu0 0.0
  %171 = vmatpush2.msra.mxu0 0.0
  %172 = vmatprep.subr.mxu0 0.0
  %173 = vmatpush2.msra.mxu0 0.0
  %174 = vmatprep.subr.mxu0 0.0
  %175 = vmatpush2.msra.mxu0 0.0
  %176 = vmatprep.subr.mxu0 0.0
  %177 = vmatpush2.msra.mxu0 0.0
  %178 = vmatprep.subr.mxu0 0.0
  %179 = vmatpush2.msra.mxu0 0.0
  %180 = vmatprep.subr.mxu0 0.0
  %181 = vmatpush2.msra.mxu0 0.0
  %182 = vmatprep.subr.mxu0 0.0
  %183 = vmatpush2.msra.mxu0 0.0
  %184 = vmatprep.subr.mxu0 0.0
  %185 = vmatpush2.msra.mxu0 0.0
  %186 = vmatprep.subr.mxu0 0.0
  %187 = vmatpush2.msra.mxu0 0.0
  %188 = vmatprep.subr.mxu0 0.0
  %189 = vmatpush2.msra.mxu0 0.0
  %190 = vmatprep.subr.mxu0 0.0
  %191 = vmatpush2.msra.mxu0 0.0
  %192 = vmatprep.mubr.f32.mxu0 0.0
  %193 = vmatmul.mubr.f32.gmra.mxu0 %v55
  %v194 = vpop.f32.mrf.mxu0
  %v195 = vadd.f32 0.0, %v194
  %v196 = vpop.f32.mrf.mxu0
  %v197 = vadd.f32 0.0, %v196
  %198 = vdwg.mxu0
  %v200 = vsel %vm53, %v23, 0
  %202 = vmatprep.subr.mxu0 0.0
  %203 = vmatpush1.msra.mxu0 0.0
  %204 = vmatprep.subr.mxu0 0.0
  %205 = vmatpush1.msra.mxu0 0.0
  %206 = vmatprep.subr.mxu0 0.0
  %207 = vmatpush1.msra.mxu0 0.0
  %208 = vmatprep.subr.mxu0 0.0
  %209 = vmatpush1.msra.mxu0 0.0
  %210 = vmatprep.subr.mxu0 0.0
  %211 = vmatpush1.msra.mxu0 0.0
  %212 = vmatprep.subr.mxu0 0.0
  %213 = vmatpush1.msra.mxu0 0.0
  %214 = vmatprep.subr.mxu0 0.0
  %215 = vmatpush1.msra.mxu0 0.0
  %216 = vmatprep.subr.mxu0 0.0
  %217 = vmatpush1.msra.mxu0 0.0
  %218 = vmatprep.subr.mxu0 0.0
  %219 = vmatpush1.msra.mxu0 0.0
  %220 = vmatprep.subr.mxu0 0.0
  %221 = vmatpush1.msra.mxu0 0.0
  %222 = vmatprep.subr.mxu0 0.0
  %223 = vmatpush1.msra.mxu0 0.0
  %224 = vmatprep.subr.mxu0 0.0
  %225 = vmatpush1.msra.mxu0 0.0
  %226 = vmatprep.subr.mxu0 0.0
  %227 = vmatpush1.msra.mxu0 0.0
  %228 = vmatprep.subr.mxu0 0.0
  %229 = vmatpush1.msra.mxu0 0.0
  %230 = vmatprep.subr.mxu0 %v17
  %231 = vmatpush1.msra.mxu0 %v16
  %232 = vmatprep.subr.mxu0 %v15
  %233 = vmatpush1.msra.mxu0 %v14
  %234 = vmatprep.subr.mxu0 0.0
  %235 = vmatpush2.msra.mxu0 0.0
  %236 = vmatprep.subr.mxu0 0.0
  %237 = vmatpush2.msra.mxu0 0.0
  %238 = vmatprep.subr.mxu0 0.0
  %239 = vmatpush2.msra.mxu0 0.0
  %240 = vmatprep.subr.mxu0 0.0
  %241 = vmatpush2.msra.mxu0 0.0
  %242 = vmatprep.subr.mxu0 0.0
  %243 = vmatpush2.msra.mxu0 0.0
  %244 = vmatprep.subr.mxu0 0.0
  %245 = vmatpush2.msra.mxu0 0.0
  %246 = vmatprep.subr.mxu0 0.0
  %247 = vmatpush2.msra.mxu0 0.0
  %248 = vmatprep.subr.mxu0 0.0
  %249 = vmatpush2.msra.mxu0 0.0
  %250 = vmatprep.subr.mxu0 0.0
  %251 = vmatpush2.msra.mxu0 0.0
  %252 = vmatprep.subr.mxu0 0.0
  %253 = vmatpush2.msra.mxu0 0.0
  %254 = vmatprep.subr.mxu0 0.0
  %255 = vmatpush2.msra.mxu0 0.0
  %256 = vmatprep.subr.mxu0 0.0
  %257 = vmatpush2.msra.mxu0 0.0
  %258 = vmatprep.subr.mxu0 0.0
  %259 = vmatpush2.msra.mxu0 0.0
  %260 = vmatprep.subr.mxu0 0.0
  %261 = vmatpush2.msra.mxu0 0.0
  %262 = vmatprep.subr.mxu0 0.0
  %263 = vmatpush2.msra.mxu0 0.0
  %264 = vmatprep.subr.mxu0 0.0
  %265 = vmatpush2.msra.mxu0 0.0
  %266 = vmatprep.mubr.f32.mxu0 0.0
  %267 = vmatmul.mubr.f32.gmra.mxu0 %v200
  %v268 = vpop.f32.mrf.mxu0
  %v269 = vadd.f32 %v124, %v268
  %v270 = vpop.f32.mrf.mxu0
  %v271 = vadd.f32 %v126, %v270
  %272 = vdwg.mxu0
  %273 = vmatprep.subr.mxu0 0.0
  %274 = vmatpush1.msra.mxu0 0.0
  %275 = vmatprep.subr.mxu0 0.0
  %276 = vmatpush1.msra.mxu0 0.0
  %277 = vmatprep.subr.mxu0 0.0
  %278 = vmatpush1.msra.mxu0 0.0
  %279 = vmatprep.subr.mxu0 0.0
  %280 = vmatpush1.msra.mxu0 0.0
  %281 = vmatprep.subr.mxu0 0.0
  %282 = vmatpush1.msra.mxu0 0.0
  %283 = vmatprep.subr.mxu0 0.0
  %284 = vmatpush1.msra.mxu0 0.0
  %285 = vmatprep.subr.mxu0 0.0
  %286 = vmatpush1.msra.mxu0 0.0
  %287 = vmatprep.subr.mxu0 0.0
  %288 = vmatpush1.msra.mxu0 0.0
  %289 = vmatprep.subr.mxu0 0.0
  %290 = vmatpush1.msra.mxu0 0.0
  %291 = vmatprep.subr.mxu0 0.0
  %292 = vmatpush1.msra.mxu0 0.0
  %293 = vmatprep.subr.mxu0 0.0
  %294 = vmatpush1.msra.mxu0 0.0
  %295 = vmatprep.subr.mxu0 0.0
  %296 = vmatpush1.msra.mxu0 0.0
  %297 = vmatprep.subr.mxu0 0.0
  %298 = vmatpush1.msra.mxu0 0.0
  %299 = vmatprep.subr.mxu0 0.0
  %300 = vmatpush1.msra.mxu0 0.0
  %301 = vmatprep.subr.mxu0 %v22
  %302 = vmatpush1.msra.mxu0 %v21
  %303 = vmatprep.subr.mxu0 %v20
  %304 = vmatpush1.msra.mxu0 %v19
  %305 = vmatprep.subr.mxu0 0.0
  %306 = vmatpush2.msra.mxu0 0.0
  %307 = vmatprep.subr.mxu0 0.0
  %308 = vmatpush2.msra.mxu0 0.0
  %309 = vmatprep.subr.mxu0 0.0
  %310 = vmatpush2.msra.mxu0 0.0
  %311 = vmatprep.subr.mxu0 0.0
  %312 = vmatpush2.msra.mxu0 0.0
  %313 = vmatprep.subr.mxu0 0.0
  %314 = vmatpush2.msra.mxu0 0.0
  %315 = vmatprep.subr.mxu0 0.0
  %316 = vmatpush2.msra.mxu0 0.0
  %317 = vmatprep.subr.mxu0 0.0
  %318 = vmatpush2.msra.mxu0 0.0
  %319 = vmatprep.subr.mxu0 0.0
  %320 = vmatpush2.msra.mxu0 0.0
  %321 = vmatprep.subr.mxu0 0.0
  %322 = vmatpush2.msra.mxu0 0.0
  %323 = vmatprep.subr.mxu0 0.0
  %324 = vmatpush2.msra.mxu0 0.0
  %325 = vmatprep.subr.mxu0 0.0
  %326 = vmatpush2.msra.mxu0 0.0
  %327 = vmatprep.subr.mxu0 0.0
  %328 = vmatpush2.msra.mxu0 0.0
  %329 = vmatprep.subr.mxu0 0.0
  %330 = vmatpush2.msra.mxu0 0.0
  %331 = vmatprep.subr.mxu0 0.0
  %332 = vmatpush2.msra.mxu0 0.0
  %333 = vmatprep.subr.mxu0 0.0
  %334 = vmatpush2.msra.mxu0 0.0
  %335 = vmatprep.subr.mxu0 0.0
  %336 = vmatpush2.msra.mxu0 0.0
  %337 = vmatprep.mubr.f32.mxu0 0.0
  %338 = vmatmul.mubr.f32.gmra.mxu0 %v200
  %v339 = vpop.f32.mrf.mxu0
  %v340 = vadd.f32 %v195, %v339
  %v341 = vpop.f32.mrf.mxu0
  %v342 = vadd.f32 %v197, %v341
  %343 = vdwg.mxu0
  %344 = vrot.lane.b32.xlu0 %v14, 126
  %v345 = vpop.permute.xlu0 %344
  %346 = vrot.lane.b32.xlu0 %v16, 126
  %v347 = vpop.permute.xlu0 %346
  %348 = vrot.lane.b32.xlu0 %v15, 126
  %v349 = vpop.permute.xlu0 %348
  %350 = vrot.lane.b32.xlu0 %v17, 126
  %v351 = vpop.permute.xlu0 %350
  %352 = vrot.lane.b32.xlu0 %v19, 126
  %v353 = vpop.permute.xlu0 %352
  %354 = vrot.lane.b32.xlu0 %v21, 126
  %v355 = vpop.permute.xlu0 %354
  %356 = vrot.lane.b32.xlu0 %v20, 126
  %v357 = vpop.permute.xlu0 %356
  %358 = vrot.lane.b32.xlu0 %v22, 126
  %v359 = vpop.permute.xlu0 %358
  %vm360 = vcmp.lt.s32.totalorder %v41, 126
  %v361 = vsel %vm360, %v353, %v357
  %v362 = vsel %vm360, %v355, %v359
  %v363 = vsel %vm360, %v349, %v353
  %v364 = vsel %vm360, %v351, %v355
  %v365 = vsel %vm360, %v345, %v349
  %v366 = vsel %vm360, %v347, %v351
  %v367 = vsel %vm360, %v357, %v345
  %v368 = vsel %vm360, %v359, %v347
  %s369 = scalar_lea.vmem %s1, 8
  %v370 = vld [vmem:[%s369] sm:$0xf]
  %v372 = vsel %vm53, %v370, 0
  %374 = vmatprep.subr.mxu0 0.0
  %375 = vmatpush1.msra.mxu0 0.0
  %376 = vmatprep.subr.mxu0 0.0
  %377 = vmatpush1.msra.mxu0 0.0
  %378 = vmatprep.subr.mxu0 0.0
  %379 = vmatpush1.msra.mxu0 0.0
  %380 = vmatprep.subr.mxu0 0.0
  %381 = vmatpush1.msra.mxu0 0.0
  %382 = vmatprep.subr.mxu0 0.0
  %383 = vmatpush1.msra.mxu0 0.0
  %384 = vmatprep.subr.mxu0 0.0
  %385 = vmatpush1.msra.mxu0 0.0
  %386 = vmatprep.subr.mxu0 0.0
  %387 = vmatpush1.msra.mxu0 0.0
  %388 = vmatprep.subr.mxu0 0.0
  %389 = vmatpush1.msra.mxu0 0.0
  %390 = vmatprep.subr.mxu0 0.0
  %391 = vmatpush1.msra.mxu0 0.0
  %392 = vmatprep.subr.mxu0 0.0
  %393 = vmatpush1.msra.mxu0 0.0
  %394 = vmatprep.subr.mxu0 0.0
  %395 = vmatpush1.msra.mxu0 0.0
  %396 = vmatprep.subr.mxu0 0.0
  %397 = vmatpush1.msra.mxu0 0.0
  %398 = vmatprep.subr.mxu0 0.0
  %399 = vmatpush1.msra.mxu0 0.0
  %400 = vmatprep.subr.mxu0 0.0
  %401 = vmatpush1.msra.mxu0 0.0
  %402 = vmatprep.subr.mxu0 %v364
  %403 = vmatpush1.msra.mxu0 %v366
  %404 = vmatprep.subr.mxu0 %v363
  %405 = vmatpush1.msra.mxu0 %v365
  %406 = vmatprep.subr.mxu0 0.0
  %407 = vmatpush2.msra.mxu0 0.0
  %408 = vmatprep.subr.mxu0 0.0
  %409 = vmatpush2.msra.mxu0 0.0
  %410 = vmatprep.subr.mxu0 0.0
  %411 = vmatpush2.msra.mxu0 0.0
  %412 = vmatprep.subr.mxu0 0.0
  %413 = vmatpush2.msra.mxu0 0.0
  %414 = vmatprep.subr.mxu0 0.0
  %415 = vmatpush2.msra.mxu0 0.0
  %416 = vmatprep.subr.mxu0 0.0
  %417 = vmatpush2.msra.mxu0 0.0
  %418 = vmatprep.subr.mxu0 0.0
  %419 = vmatpush2.msra.mxu0 0.0
  %420 = vmatprep.subr.mxu0 0.0
  %421 = vmatpush2.msra.mxu0 0.0
  %422 = vmatprep.subr.mxu0 0.0
  %423 = vmatpush2.msra.mxu0 0.0
  %424 = vmatprep.subr.mxu0 0.0
  %425 = vmatpush2.msra.mxu0 0.0
  %426 = vmatprep.subr.mxu0 0.0
  %427 = vmatpush2.msra.mxu0 0.0
  %428 = vmatprep.subr.mxu0 0.0
  %429 = vmatpush2.msra.mxu0 0.0
  %430 = vmatprep.subr.mxu0 0.0
  %431 = vmatpush2.msra.mxu0 0.0
  %432 = vmatprep.subr.mxu0 0.0
  %433 = vmatpush2.msra.mxu0 0.0
  %434 = vmatprep.subr.mxu0 0.0
  %435 = vmatpush2.msra.mxu0 0.0
  %436 = vmatprep.subr.mxu0 0.0
  %437 = vmatpush2.msra.mxu0 0.0
  %438 = vmatprep.mubr.f32.mxu0 0.0
  %439 = vmatmul.mubr.f32.gmra.mxu0 %v372
  %v440 = vpop.f32.mrf.mxu0
  %v441 = vadd.f32 0.0, %v440
  %v442 = vpop.f32.mrf.mxu0
  %v443 = vadd.f32 0.0, %v442
  %444 = vdwg.mxu0
  %445 = vmatprep.subr.mxu0 0.0
  %446 = vmatpush1.msra.mxu0 0.0
  %447 = vmatprep.subr.mxu0 0.0
  %448 = vmatpush1.msra.mxu0 0.0
  %449 = vmatprep.subr.mxu0 0.0
  %450 = vmatpush1.msra.mxu0 0.0
  %451 = vmatprep.subr.mxu0 0.0
  %452 = vmatpush1.msra.mxu0 0.0
  %453 = vmatprep.subr.mxu0 0.0
  %454 = vmatpush1.msra.mxu0 0.0
  %455 = vmatprep.subr.mxu0 0.0
  %456 = vmatpush1.msra.mxu0 0.0
  %457 = vmatprep.subr.mxu0 0.0
  %458 = vmatpush1.msra.mxu0 0.0
  %459 = vmatprep.subr.mxu0 0.0
  %460 = vmatpush1.msra.mxu0 0.0
  %461 = vmatprep.subr.mxu0 0.0
  %462 = vmatpush1.msra.mxu0 0.0
  %463 = vmatprep.subr.mxu0 0.0
  %464 = vmatpush1.msra.mxu0 0.0
  %465 = vmatprep.subr.mxu0 0.0
  %466 = vmatpush1.msra.mxu0 0.0
  %467 = vmatprep.subr.mxu0 0.0
  %468 = vmatpush1.msra.mxu0 0.0
  %469 = vmatprep.subr.mxu0 0.0
  %470 = vmatpush1.msra.mxu0 0.0
  %471 = vmatprep.subr.mxu0 0.0
  %472 = vmatpush1.msra.mxu0 0.0
  %473 = vmatprep.subr.mxu0 %v368
  %474 = vmatpush1.msra.mxu0 %v362
  %475 = vmatprep.subr.mxu0 %v367
  %476 = vmatpush1.msra.mxu0 %v361
  %477 = vmatprep.subr.mxu0 0.0
  %478 = vmatpush2.msra.mxu0 0.0
  %479 = vmatprep.subr.mxu0 0.0
  %480 = vmatpush2.msra.mxu0 0.0
  %481 = vmatprep.subr.mxu0 0.0
  %482 = vmatpush2.msra.mxu0 0.0
  %483 = vmatprep.subr.mxu0 0.0
  %484 = vmatpush2.msra.mxu0 0.0
  %485 = vmatprep.subr.mxu0 0.0
  %486 = vmatpush2.msra.mxu0 0.0
  %487 = vmatprep.subr.mxu0 0.0
  %488 = vmatpush2.msra.mxu0 0.0
  %489 = vmatprep.subr.mxu0 0.0
  %490 = vmatpush2.msra.mxu0 0.0
  %491 = vmatprep.subr.mxu0 0.0
  %492 = vmatpush2.msra.mxu0 0.0
  %493 = vmatprep.subr.mxu0 0.0
  %494 = vmatpush2.msra.mxu0 0.0
  %495 = vmatprep.subr.mxu0 0.0
  %496 = vmatpush2.msra.mxu0 0.0
  %497 = vmatprep.subr.mxu0 0.0
  %498 = vmatpush2.msra.mxu0 0.0
  %499 = vmatprep.subr.mxu0 0.0
  %500 = vmatpush2.msra.mxu0 0.0
  %501 = vmatprep.subr.mxu0 0.0
  %502 = vmatpush2.msra.mxu0 0.0
  %503 = vmatprep.subr.mxu0 0.0
  %504 = vmatpush2.msra.mxu0 0.0
  %505 = vmatprep.subr.mxu0 0.0
  %506 = vmatpush2.msra.mxu0 0.0
  %507 = vmatprep.subr.mxu0 0.0
  %508 = vmatpush2.msra.mxu0 0.0
  %509 = vmatprep.mubr.f32.mxu0 0.0
  %510 = vmatmul.mubr.f32.gmra.mxu0 %v372
  %v511 = vpop.f32.mrf.mxu0
  %v512 = vadd.f32 0.0, %v511
  %v513 = vpop.f32.mrf.mxu0
  %v514 = vadd.f32 0.0, %v513
  %515 = vdwg.mxu0
  %v516 = vadd.f32 %v269, %v441
  %v517 = vadd.f32 %v271, %v443
  %v518 = vadd.f32 %v340, %v512
  %v519 = vadd.f32 %v342, %v514
  %520 = vrot.lane.b32.xlu0 %v14, 112
  %v521 = vpop.permute.xlu0 %520
  %522 = vrot.lane.b32.xlu0 %v16, 112
  %v523 = vpop.permute.xlu0 %522
  %524 = vrot.lane.b32.xlu0 %v15, 112
  %v525 = vpop.permute.xlu0 %524
  %526 = vrot.lane.b32.xlu0 %v17, 112
  %v527 = vpop.permute.xlu0 %526
  %528 = vrot.lane.b32.xlu0 %v19, 112
  %v529 = vpop.permute.xlu0 %528
  %530 = vrot.lane.b32.xlu0 %v21, 112
  %v531 = vpop.permute.xlu0 %530
  %532 = vrot.lane.b32.xlu0 %v20, 112
  %v533 = vpop.permute.xlu0 %532
  %534 = vrot.lane.b32.xlu0 %v22, 112
  %v535 = vpop.permute.xlu0 %534
  %vm536 = vcmp.lt.s32.totalorder %v41, 112
  %v537 = vsel %vm536, %v529, %v533
  %v538 = vsel %vm536, %v531, %v535
  %v539 = vsel %vm536, %v525, %v529
  %v540 = vsel %vm536, %v527, %v531
  %v541 = vsel %vm536, %v521, %v525
  %v542 = vsel %vm536, %v523, %v527
  %v543 = vsel %vm536, %v533, %v521
  %v544 = vsel %vm536, %v535, %v523
  %s545 = scalar_lea.vmem %s1, 12
  %v546 = vld [vmem:[%s545] sm:$0xf]
  %v548 = vsel %vm53, %v546, 0
  %550 = vmatprep.subr.mxu0 0.0
  %551 = vmatpush1.msra.mxu0 0.0
  %552 = vmatprep.subr.mxu0 0.0
  %553 = vmatpush1.msra.mxu0 0.0
  %554 = vmatprep.subr.mxu0 0.0
  %555 = vmatpush1.msra.mxu0 0.0
  %556 = vmatprep.subr.mxu0 0.0
  %557 = vmatpush1.msra.mxu0 0.0
  %558 = vmatprep.subr.mxu0 0.0
  %559 = vmatpush1.msra.mxu0 0.0
  %560 = vmatprep.subr.mxu0 0.0
  %561 = vmatpush1.msra.mxu0 0.0
  %562 = vmatprep.subr.mxu0 0.0
  %563 = vmatpush1.msra.mxu0 0.0
  %564 = vmatprep.subr.mxu0 0.0
  %565 = vmatpush1.msra.mxu0 0.0
  %566 = vmatprep.subr.mxu0 0.0
  %567 = vmatpush1.msra.mxu0 0.0
  %568 = vmatprep.subr.mxu0 0.0
  %569 = vmatpush1.msra.mxu0 0.0
  %570 = vmatprep.subr.mxu0 0.0
  %571 = vmatpush1.msra.mxu0 0.0
  %572 = vmatprep.subr.mxu0 0.0
  %573 = vmatpush1.msra.mxu0 0.0
  %574 = vmatprep.subr.mxu0 0.0
  %575 = vmatpush1.msra.mxu0 0.0
  %576 = vmatprep.subr.mxu0 0.0
  %577 = vmatpush1.msra.mxu0 0.0
  %578 = vmatprep.subr.mxu0 %v540
  %579 = vmatpush1.msra.mxu0 %v542
  %580 = vmatprep.subr.mxu0 %v539
  %581 = vmatpush1.msra.mxu0 %v541
  %582 = vmatprep.subr.mxu0 0.0
  %583 = vmatpush2.msra.mxu0 0.0
  %584 = vmatprep.subr.mxu0 0.0
  %585 = vmatpush2.msra.mxu0 0.0
  %586 = vmatprep.subr.mxu0 0.0
  %587 = vmatpush2.msra.mxu0 0.0
  %588 = vmatprep.subr.mxu0 0.0
  %589 = vmatpush2.msra.mxu0 0.0
  %590 = vmatprep.subr.mxu0 0.0
  %591 = vmatpush2.msra.mxu0 0.0
  %592 = vmatprep.subr.mxu0 0.0
  %593 = vmatpush2.msra.mxu0 0.0
  %594 = vmatprep.subr.mxu0 0.0
  %595 = vmatpush2.msra.mxu0 0.0
  %596 = vmatprep.subr.mxu0 0.0
  %597 = vmatpush2.msra.mxu0 0.0
  %598 = vmatprep.subr.mxu0 0.0
  %599 = vmatpush2.msra.mxu0 0.0
  %600 = vmatprep.subr.mxu0 0.0
  %601 = vmatpush2.msra.mxu0 0.0
  %602 = vmatprep.subr.mxu0 0.0
  %603 = vmatpush2.msra.mxu0 0.0
  %604 = vmatprep.subr.mxu0 0.0
  %605 = vmatpush2.msra.mxu0 0.0
  %606 = vmatprep.subr.mxu0 0.0
  %607 = vmatpush2.msra.mxu0 0.0
  %608 = vmatprep.subr.mxu0 0.0
  %609 = vmatpush2.msra.mxu0 0.0
  %610 = vmatprep.subr.mxu0 0.0
  %611 = vmatpush2.msra.mxu0 0.0
  %612 = vmatprep.subr.mxu0 0.0
  %613 = vmatpush2.msra.mxu0 0.0
  %614 = vmatprep.mubr.f32.mxu0 0.0
  %615 = vmatmul.mubr.f32.gmra.mxu0 %v548
  %v616 = vpop.f32.mrf.mxu0
  %v617 = vadd.f32 0.0, %v616
  %v618 = vpop.f32.mrf.mxu0
  %v619 = vadd.f32 0.0, %v618
  %620 = vdwg.mxu0
  %621 = vmatprep.subr.mxu0 0.0
  %622 = vmatpush1.msra.mxu0 0.0
  %623 = vmatprep.subr.mxu0 0.0
  %624 = vmatpush1.msra.mxu0 0.0
  %625 = vmatprep.subr.mxu0 0.0
  %626 = vmatpush1.msra.mxu0 0.0
  %627 = vmatprep.subr.mxu0 0.0
  %628 = vmatpush1.msra.mxu0 0.0
  %629 = vmatprep.subr.mxu0 0.0
  %630 = vmatpush1.msra.mxu0 0.0
  %631 = vmatprep.subr.mxu0 0.0
  %632 = vmatpush1.msra.mxu0 0.0
  %633 = vmatprep.subr.mxu0 0.0
  %634 = vmatpush1.msra.mxu0 0.0
  %635 = vmatprep.subr.mxu0 0.0
  %636 = vmatpush1.msra.mxu0 0.0
  %637 = vmatprep.subr.mxu0 0.0
  %638 = vmatpush1.msra.mxu0 0.0
  %639 = vmatprep.subr.mxu0 0.0
  %640 = vmatpush1.msra.mxu0 0.0
  %641 = vmatprep.subr.mxu0 0.0
  %642 = vmatpush1.msra.mxu0 0.0
  %643 = vmatprep.subr.mxu0 0.0
  %644 = vmatpush1.msra.mxu0 0.0
  %645 = vmatprep.subr.mxu0 0.0
  %646 = vmatpush1.msra.mxu0 0.0
  %647 = vmatprep.subr.mxu0 0.0
  %648 = vmatpush1.msra.mxu0 0.0
  %649 = vmatprep.subr.mxu0 %v544
  %650 = vmatpush1.msra.mxu0 %v538
  %651 = vmatprep.subr.mxu0 %v543
  %652 = vmatpush1.msra.mxu0 %v537
  %653 = vmatprep.subr.mxu0 0.0
  %654 = vmatpush2.msra.mxu0 0.0
  %655 = vmatprep.subr.mxu0 0.0
  %656 = vmatpush2.msra.mxu0 0.0
  %657 = vmatprep.subr.mxu0 0.0
  %658 = vmatpush2.msra.mxu0 0.0
  %659 = vmatprep.subr.mxu0 0.0
  %660 = vmatpush2.msra.mxu0 0.0
  %661 = vmatprep.subr.mxu0 0.0
  %662 = vmatpush2.msra.mxu0 0.0
  %663 = vmatprep.subr.mxu0 0.0
  %664 = vmatpush2.msra.mxu0 0.0
  %665 = vmatprep.subr.mxu0 0.0
  %666 = vmatpush2.msra.mxu0 0.0
  %667 = vmatprep.subr.mxu0 0.0
  %668 = vmatpush2.msra.mxu0 0.0
  %669 = vmatprep.subr.mxu0 0.0
  %670 = vmatpush2.msra.mxu0 0.0
  %671 = vmatprep.subr.mxu0 0.0
  %672 = vmatpush2.msra.mxu0 0.0
  %673 = vmatprep.subr.mxu0 0.0
  %674 = vmatpush2.msra.mxu0 0.0
  %675 = vmatprep.subr.mxu0 0.0
  %676 = vmatpush2.msra.mxu0 0.0
  %677 = vmatprep.subr.mxu0 0.0
  %678 = vmatpush2.msra.mxu0 0.0
  %679 = vmatprep.subr.mxu0 0.0
  %680 = vmatpush2.msra.mxu0 0.0
  %681 = vmatprep.subr.mxu0 0.0
  %682 = vmatpush2.msra.mxu0 0.0
  %683 = vmatprep.subr.mxu0 0.0
  %684 = vmatpush2.msra.mxu0 0.0
  %685 = vmatprep.mubr.f32.mxu0 0.0
  %686 = vmatmul.mubr.f32.gmra.mxu0 %v548
  %v687 = vpop.f32.mrf.mxu0
  %v688 = vadd.f32 0.0, %v687
  %v689 = vpop.f32.mrf.mxu0
  %v690 = vadd.f32 0.0, %v689
  %691 = vdwg.mxu0
  %v692 = vadd.f32 %v516, %v617
  %v693 = vadd.f32 %v517, %v619
  %v694 = vadd.f32 %v518, %v688
  %v695 = vadd.f32 %v519, %v690
  %696 = vrot.lane.b32.xlu0 %v14, 111
  %v697 = vpop.permute.xlu0 %696
  %698 = vrot.lane.b32.xlu0 %v16, 111
  %v699 = vpop.permute.xlu0 %698
  %700 = vrot.lane.b32.xlu0 %v15, 111
  %v701 = vpop.permute.xlu0 %700
  %702 = vrot.lane.b32.xlu0 %v17, 111
  %v703 = vpop.permute.xlu0 %702
  %704 = vrot.lane.b32.xlu0 %v19, 111
  %v705 = vpop.permute.xlu0 %704
  %706 = vrot.lane.b32.xlu0 %v21, 111
  %v707 = vpop.permute.xlu0 %706
  %708 = vrot.lane.b32.xlu0 %v20, 111
  %v709 = vpop.permute.xlu0 %708
  %710 = vrot.lane.b32.xlu0 %v22, 111
  %v711 = vpop.permute.xlu0 %710
  %vm712 = vcmp.lt.s32.totalorder %v41, 111
  %v713 = vsel %vm712, %v705, %v709
  %v714 = vsel %vm712, %v707, %v711
  %v715 = vsel %vm712, %v701, %v705
  %v716 = vsel %vm712, %v703, %v707
  %v717 = vsel %vm712, %v697, %v701
  %v718 = vsel %vm712, %v699, %v703
  %v719 = vsel %vm712, %v709, %v697
  %v720 = vsel %vm712, %v711, %v699
  %s721 = scalar_lea.vmem %s1, 16
  %v722 = vld [vmem:[%s721] sm:$0xf]
  %v724 = vsel %vm53, %v722, 0
  %726 = vmatprep.subr.mxu0 0.0
  %727 = vmatpush1.msra.mxu0 0.0
  %728 = vmatprep.subr.mxu0 0.0
  %729 = vmatpush1.msra.mxu0 0.0
  %730 = vmatprep.subr.mxu0 0.0
  %731 = vmatpush1.msra.mxu0 0.0
  %732 = vmatprep.subr.mxu0 0.0
  %733 = vmatpush1.msra.mxu0 0.0
  %734 = vmatprep.subr.mxu0 0.0
  %735 = vmatpush1.msra.mxu0 0.0
  %736 = vmatprep.subr.mxu0 0.0
  %737 = vmatpush1.msra.mxu0 0.0
  %738 = vmatprep.subr.mxu0 0.0
  %739 = vmatpush1.msra.mxu0 0.0
  %740 = vmatprep.subr.mxu0 0.0
  %741 = vmatpush1.msra.mxu0 0.0
  %742 = vmatprep.subr.mxu0 0.0
  %743 = vmatpush1.msra.mxu0 0.0
  %744 = vmatprep.subr.mxu0 0.0
  %745 = vmatpush1.msra.mxu0 0.0
  %746 = vmatprep.subr.mxu0 0.0
  %747 = vmatpush1.msra.mxu0 0.0
  %748 = vmatprep.subr.mxu0 0.0
  %749 = vmatpush1.msra.mxu0 0.0
  %750 = vmatprep.subr.mxu0 0.0
  %751 = vmatpush1.msra.mxu0 0.0
  %752 = vmatprep.subr.mxu0 0.0
  %753 = vmatpush1.msra.mxu0 0.0
  %754 = vmatprep.subr.mxu0 %v716
  %755 = vmatpush1.msra.mxu0 %v718
  %756 = vmatprep.subr.mxu0 %v715
  %757 = vmatpush1.msra.mxu0 %v717
  %758 = vmatprep.subr.mxu0 0.0
  %759 = vmatpush2.msra.mxu0 0.0
  %760 = vmatprep.subr.mxu0 0.0
  %761 = vmatpush2.msra.mxu0 0.0
  %762 = vmatprep.subr.mxu0 0.0
  %763 = vmatpush2.msra.mxu0 0.0
  %764 = vmatprep.subr.mxu0 0.0
  %765 = vmatpush2.msra.mxu0 0.0
  %766 = vmatprep.subr.mxu0 0.0
  %767 = vmatpush2.msra.mxu0 0.0
  %768 = vmatprep.subr.mxu0 0.0
  %769 = vmatpush2.msra.mxu0 0.0
  %770 = vmatprep.subr.mxu0 0.0
  %771 = vmatpush2.msra.mxu0 0.0
  %772 = vmatprep.subr.mxu0 0.0
  %773 = vmatpush2.msra.mxu0 0.0
  %774 = vmatprep.subr.mxu0 0.0
  %775 = vmatpush2.msra.mxu0 0.0
  %776 = vmatprep.subr.mxu0 0.0
  %777 = vmatpush2.msra.mxu0 0.0
  %778 = vmatprep.subr.mxu0 0.0
  %779 = vmatpush2.msra.mxu0 0.0
  %780 = vmatprep.subr.mxu0 0.0
  %781 = vmatpush2.msra.mxu0 0.0
  %782 = vmatprep.subr.mxu0 0.0
  %783 = vmatpush2.msra.mxu0 0.0
  %784 = vmatprep.subr.mxu0 0.0
  %785 = vmatpush2.msra.mxu0 0.0
  %786 = vmatprep.subr.mxu0 0.0
  %787 = vmatpush2.msra.mxu0 0.0
  %788 = vmatprep.subr.mxu0 0.0
  %789 = vmatpush2.msra.mxu0 0.0
  %790 = vmatprep.mubr.f32.mxu0 0.0
  %791 = vmatmul.mubr.f32.gmra.mxu0 %v724
  %v792 = vpop.f32.mrf.mxu0
  %v793 = vadd.f32 0.0, %v792
  %v794 = vpop.f32.mrf.mxu0
  %v795 = vadd.f32 0.0, %v794
  %796 = vdwg.mxu0
  %797 = vmatprep.subr.mxu0 0.0
  %798 = vmatpush1.msra.mxu0 0.0
  %799 = vmatprep.subr.mxu0 0.0
  %800 = vmatpush1.msra.mxu0 0.0
  %801 = vmatprep.subr.mxu0 0.0
  %802 = vmatpush1.msra.mxu0 0.0
  %803 = vmatprep.subr.mxu0 0.0
  %804 = vmatpush1.msra.mxu0 0.0
  %805 = vmatprep.subr.mxu0 0.0
  %806 = vmatpush1.msra.mxu0 0.0
  %807 = vmatprep.subr.mxu0 0.0
  %808 = vmatpush1.msra.mxu0 0.0
  %809 = vmatprep.subr.mxu0 0.0
  %810 = vmatpush1.msra.mxu0 0.0
  %811 = vmatprep.subr.mxu0 0.0
  %812 = vmatpush1.msra.mxu0 0.0
  %813 = vmatprep.subr.mxu0 0.0
  %814 = vmatpush1.msra.mxu0 0.0
  %815 = vmatprep.subr.mxu0 0.0
  %816 = vmatpush1.msra.mxu0 0.0
  %817 = vmatprep.subr.mxu0 0.0
  %818 = vmatpush1.msra.mxu0 0.0
  %819 = vmatprep.subr.mxu0 0.0
  %820 = vmatpush1.msra.mxu0 0.0
  %821 = vmatprep.subr.mxu0 0.0
  %822 = vmatpush1.msra.mxu0 0.0
  %823 = vmatprep.subr.mxu0 0.0
  %824 = vmatpush1.msra.mxu0 0.0
  %825 = vmatprep.subr.mxu0 %v720
  %826 = vmatpush1.msra.mxu0 %v714
  %827 = vmatprep.subr.mxu0 %v719
  %828 = vmatpush1.msra.mxu0 %v713
  %829 = vmatprep.subr.mxu0 0.0
  %830 = vmatpush2.msra.mxu0 0.0
  %831 = vmatprep.subr.mxu0 0.0
  %832 = vmatpush2.msra.mxu0 0.0
  %833 = vmatprep.subr.mxu0 0.0
  %834 = vmatpush2.msra.mxu0 0.0
  %835 = vmatprep.subr.mxu0 0.0
  %836 = vmatpush2.msra.mxu0 0.0
  %837 = vmatprep.subr.mxu0 0.0
  %838 = vmatpush2.msra.mxu0 0.0
  %839 = vmatprep.subr.mxu0 0.0
  %840 = vmatpush2.msra.mxu0 0.0
  %841 = vmatprep.subr.mxu0 0.0
  %842 = vmatpush2.msra.mxu0 0.0
  %843 = vmatprep.subr.mxu0 0.0
  %844 = vmatpush2.msra.mxu0 0.0
  %845 = vmatprep.subr.mxu0 0.0
  %846 = vmatpush2.msra.mxu0 0.0
  %847 = vmatprep.subr.mxu0 0.0
  %848 = vmatpush2.msra.mxu0 0.0
  %849 = vmatprep.subr.mxu0 0.0
  %850 = vmatpush2.msra.mxu0 0.0
  %851 = vmatprep.subr.mxu0 0.0
  %852 = vmatpush2.msra.mxu0 0.0
  %853 = vmatprep.subr.mxu0 0.0
  %854 = vmatpush2.msra.mxu0 0.0
  %855 = vmatprep.subr.mxu0 0.0
  %856 = vmatpush2.msra.mxu0 0.0
  %857 = vmatprep.subr.mxu0 0.0
  %858 = vmatpush2.msra.mxu0 0.0
  %859 = vmatprep.subr.mxu0 0.0
  %860 = vmatpush2.msra.mxu0 0.0
  %861 = vmatprep.mubr.f32.mxu0 0.0
  %862 = vmatmul.mubr.f32.gmra.mxu0 %v724
  %v863 = vpop.f32.mrf.mxu0
  %v864 = vadd.f32 0.0, %v863
  %v865 = vpop.f32.mrf.mxu0
  %v866 = vadd.f32 0.0, %v865
  %867 = vdwg.mxu0
  %v868 = vadd.f32 %v692, %v793
  %v869 = vadd.f32 %v693, %v795
  %v870 = vadd.f32 %v694, %v864
  %v871 = vadd.f32 %v695, %v866
  %872 = vrot.lane.b32.xlu0 %v14, 110
  %v873 = vpop.permute.xlu0 %872
  %874 = vrot.lane.b32.xlu0 %v16, 110
  %v875 = vpop.permute.xlu0 %874
  %876 = vrot.lane.b32.xlu0 %v15, 110
  %v877 = vpop.permute.xlu0 %876
  %878 = vrot.lane.b32.xlu0 %v17, 110
  %v879 = vpop.permute.xlu0 %878
  %880 = vrot.lane.b32.xlu0 %v19, 110
  %v881 = vpop.permute.xlu0 %880
  %882 = vrot.lane.b32.xlu0 %v21, 110
  %v883 = vpop.permute.xlu0 %882
  %884 = vrot.lane.b32.xlu0 %v20, 110
  %v885 = vpop.permute.xlu0 %884
  %886 = vrot.lane.b32.xlu0 %v22, 110
  %v887 = vpop.permute.xlu0 %886
  %vm888 = vcmp.lt.s32.totalorder %v41, 110
  %v889 = vsel %vm888, %v881, %v885
  %v890 = vsel %vm888, %v883, %v887
  %v891 = vsel %vm888, %v877, %v881
  %v892 = vsel %vm888, %v879, %v883
  %v893 = vsel %vm888, %v873, %v877
  %v894 = vsel %vm888, %v875, %v879
  %v895 = vsel %vm888, %v885, %v873
  %v896 = vsel %vm888, %v887, %v875
  %s897 = scalar_lea.vmem %s1, 20
  %v898 = vld [vmem:[%s897] sm:$0xf]
  %v900 = vsel %vm53, %v898, 0
  %902 = vmatprep.subr.mxu0 0.0
  %903 = vmatpush1.msra.mxu0 0.0
  %904 = vmatprep.subr.mxu0 0.0
  %905 = vmatpush1.msra.mxu0 0.0
  %906 = vmatprep.subr.mxu0 0.0
  %907 = vmatpush1.msra.mxu0 0.0
  %908 = vmatprep.subr.mxu0 0.0
  %909 = vmatpush1.msra.mxu0 0.0
  %910 = vmatprep.subr.mxu0 0.0
  %911 = vmatpush1.msra.mxu0 0.0
  %912 = vmatprep.subr.mxu0 0.0
  %913 = vmatpush1.msra.mxu0 0.0
  %914 = vmatprep.subr.mxu0 0.0
  %915 = vmatpush1.msra.mxu0 0.0
  %916 = vmatprep.subr.mxu0 0.0
  %917 = vmatpush1.msra.mxu0 0.0
  %918 = vmatprep.subr.mxu0 0.0
  %919 = vmatpush1.msra.mxu0 0.0
  %920 = vmatprep.subr.mxu0 0.0
  %921 = vmatpush1.msra.mxu0 0.0
  %922 = vmatprep.subr.mxu0 0.0
  %923 = vmatpush1.msra.mxu0 0.0
  %924 = vmatprep.subr.mxu0 0.0
  %925 = vmatpush1.msra.mxu0 0.0
  %926 = vmatprep.subr.mxu0 0.0
  %927 = vmatpush1.msra.mxu0 0.0
  %928 = vmatprep.subr.mxu0 0.0
  %929 = vmatpush1.msra.mxu0 0.0
  %930 = vmatprep.subr.mxu0 %v892
  %931 = vmatpush1.msra.mxu0 %v894
  %932 = vmatprep.subr.mxu0 %v891
  %933 = vmatpush1.msra.mxu0 %v893
  %934 = vmatprep.subr.mxu0 0.0
  %935 = vmatpush2.msra.mxu0 0.0
  %936 = vmatprep.subr.mxu0 0.0
  %937 = vmatpush2.msra.mxu0 0.0
  %938 = vmatprep.subr.mxu0 0.0
  %939 = vmatpush2.msra.mxu0 0.0
  %940 = vmatprep.subr.mxu0 0.0
  %941 = vmatpush2.msra.mxu0 0.0
  %942 = vmatprep.subr.mxu0 0.0
  %943 = vmatpush2.msra.mxu0 0.0
  %944 = vmatprep.subr.mxu0 0.0
  %945 = vmatpush2.msra.mxu0 0.0
  %946 = vmatprep.subr.mxu0 0.0
  %947 = vmatpush2.msra.mxu0 0.0
  %948 = vmatprep.subr.mxu0 0.0
  %949 = vmatpush2.msra.mxu0 0.0
  %950 = vmatprep.subr.mxu0 0.0
  %951 = vmatpush2.msra.mxu0 0.0
  %952 = vmatprep.subr.mxu0 0.0
  %953 = vmatpush2.msra.mxu0 0.0
  %954 = vmatprep.subr.mxu0 0.0
  %955 = vmatpush2.msra.mxu0 0.0
  %956 = vmatprep.subr.mxu0 0.0
  %957 = vmatpush2.msra.mxu0 0.0
  %958 = vmatprep.subr.mxu0 0.0
  %959 = vmatpush2.msra.mxu0 0.0
  %960 = vmatprep.subr.mxu0 0.0
  %961 = vmatpush2.msra.mxu0 0.0
  %962 = vmatprep.subr.mxu0 0.0
  %963 = vmatpush2.msra.mxu0 0.0
  %964 = vmatprep.subr.mxu0 0.0
  %965 = vmatpush2.msra.mxu0 0.0
  %966 = vmatprep.mubr.f32.mxu0 0.0
  %967 = vmatmul.mubr.f32.gmra.mxu0 %v900
  %v968 = vpop.f32.mrf.mxu0
  %v969 = vadd.f32 0.0, %v968
  %v970 = vpop.f32.mrf.mxu0
  %v971 = vadd.f32 0.0, %v970
  %972 = vdwg.mxu0
  %973 = vmatprep.subr.mxu0 0.0
  %974 = vmatpush1.msra.mxu0 0.0
  %975 = vmatprep.subr.mxu0 0.0
  %976 = vmatpush1.msra.mxu0 0.0
  %977 = vmatprep.subr.mxu0 0.0
  %978 = vmatpush1.msra.mxu0 0.0
  %979 = vmatprep.subr.mxu0 0.0
  %980 = vmatpush1.msra.mxu0 0.0
  %981 = vmatprep.subr.mxu0 0.0
  %982 = vmatpush1.msra.mxu0 0.0
  %983 = vmatprep.subr.mxu0 0.0
  %984 = vmatpush1.msra.mxu0 0.0
  %985 = vmatprep.subr.mxu0 0.0
  %986 = vmatpush1.msra.mxu0 0.0
  %987 = vmatprep.subr.mxu0 0.0
  %988 = vmatpush1.msra.mxu0 0.0
  %989 = vmatprep.subr.mxu0 0.0
  %990 = vmatpush1.msra.mxu0 0.0
  %991 = vmatprep.subr.mxu0 0.0
  %992 = vmatpush1.msra.mxu0 0.0
  %993 = vmatprep.subr.mxu0 0.0
  %994 = vmatpush1.msra.mxu0 0.0
  %995 = vmatprep.subr.mxu0 0.0
  %996 = vmatpush1.msra.mxu0 0.0
  %997 = vmatprep.subr.mxu0 0.0
  %998 = vmatpush1.msra.mxu0 0.0
  %999 = vmatprep.subr.mxu0 0.0
  %1000 = vmatpush1.msra.mxu0 0.0
  %1001 = vmatprep.subr.mxu0 %v896
  %1002 = vmatpush1.msra.mxu0 %v890
  %1003 = vmatprep.subr.mxu0 %v895
  %1004 = vmatpush1.msra.mxu0 %v889
  %1005 = vmatprep.subr.mxu0 0.0
  %1006 = vmatpush2.msra.mxu0 0.0
  %1007 = vmatprep.subr.mxu0 0.0
  %1008 = vmatpush2.msra.mxu0 0.0
  %1009 = vmatprep.subr.mxu0 0.0
  %1010 = vmatpush2.msra.mxu0 0.0
  %1011 = vmatprep.subr.mxu0 0.0
  %1012 = vmatpush2.msra.mxu0 0.0
  %1013 = vmatprep.subr.mxu0 0.0
  %1014 = vmatpush2.msra.mxu0 0.0
  %1015 = vmatprep.subr.mxu0 0.0
  %1016 = vmatpush2.msra.mxu0 0.0
  %1017 = vmatprep.subr.mxu0 0.0
  %1018 = vmatpush2.msra.mxu0 0.0
  %1019 = vmatprep.subr.mxu0 0.0
  %1020 = vmatpush2.msra.mxu0 0.0
  %1021 = vmatprep.subr.mxu0 0.0
  %1022 = vmatpush2.msra.mxu0 0.0
  %1023 = vmatprep.subr.mxu0 0.0
  %1024 = vmatpush2.msra.mxu0 0.0
  %1025 = vmatprep.subr.mxu0 0.0
  %1026 = vmatpush2.msra.mxu0 0.0
  %1027 = vmatprep.subr.mxu0 0.0
  %1028 = vmatpush2.msra.mxu0 0.0
  %1029 = vmatprep.subr.mxu0 0.0
  %1030 = vmatpush2.msra.mxu0 0.0
  %1031 = vmatprep.subr.mxu0 0.0
  %1032 = vmatpush2.msra.mxu0 0.0
  %1033 = vmatprep.subr.mxu0 0.0
  %1034 = vmatpush2.msra.mxu0 0.0
  %1035 = vmatprep.subr.mxu0 0.0
  %1036 = vmatpush2.msra.mxu0 0.0
  %1037 = vmatprep.mubr.f32.mxu0 0.0
  %1038 = vmatmul.mubr.f32.gmra.mxu0 %v900
  %v1039 = vpop.f32.mrf.mxu0
  %v1040 = vadd.f32 0.0, %v1039
  %v1041 = vpop.f32.mrf.mxu0
  %v1042 = vadd.f32 0.0, %v1041
  %1043 = vdwg.mxu0
  %v1044 = vadd.f32 %v868, %v969
  %v1045 = vadd.f32 %v869, %v971
  %v1046 = vadd.f32 %v870, %v1040
  %v1047 = vadd.f32 %v871, %v1042
  %1048 = vrot.lane.b32.xlu0 %v14, 96
  %v1049 = vpop.permute.xlu0 %1048
  %1050 = vrot.lane.b32.xlu0 %v16, 96
  %v1051 = vpop.permute.xlu0 %1050
  %1052 = vrot.lane.b32.xlu0 %v15, 96
  %v1053 = vpop.permute.xlu0 %1052
  %1054 = vrot.lane.b32.xlu0 %v17, 96
  %v1055 = vpop.permute.xlu0 %1054
  %1056 = vrot.lane.b32.xlu0 %v19, 96
  %v1057 = vpop.permute.xlu0 %1056
  %1058 = vrot.lane.b32.xlu0 %v21, 96
  %v1059 = vpop.permute.xlu0 %1058
  %1060 = vrot.lane.b32.xlu0 %v20, 96
  %v1061 = vpop.permute.xlu0 %1060
  %1062 = vrot.lane.b32.xlu0 %v22, 96
  %v1063 = vpop.permute.xlu0 %1062
  %vm1064 = vcmp.lt.s32.totalorder %v41, 96
  %v1065 = vsel %vm1064, %v1057, %v1061
  %v1066 = vsel %vm1064, %v1059, %v1063
  %v1067 = vsel %vm1064, %v1053, %v1057
  %v1068 = vsel %vm1064, %v1055, %v1059
  %v1069 = vsel %vm1064, %v1049, %v1053
  %v1070 = vsel %vm1064, %v1051, %v1055
  %v1071 = vsel %vm1064, %v1061, %v1049
  %v1072 = vsel %vm1064, %v1063, %v1051
  %s1073 = scalar_lea.vmem %s1, 24
  %v1074 = vld [vmem:[%s1073] sm:$0xf]
  %v1076 = vsel %vm53, %v1074, 0
  %1078 = vmatprep.subr.mxu0 0.0
  %1079 = vmatpush1.msra.mxu0 0.0
  %1080 = vmatprep.subr.mxu0 0.0
  %1081 = vmatpush1.msra.mxu0 0.0
  %1082 = vmatprep.subr.mxu0 0.0
  %1083 = vmatpush1.msra.mxu0 0.0
  %1084 = vmatprep.subr.mxu0 0.0
  %1085 = vmatpush1.msra.mxu0 0.0
  %1086 = vmatprep.subr.mxu0 0.0
  %1087 = vmatpush1.msra.mxu0 0.0
  %1088 = vmatprep.subr.mxu0 0.0
  %1089 = vmatpush1.msra.mxu0 0.0
  %1090 = vmatprep.subr.mxu0 0.0
  %1091 = vmatpush1.msra.mxu0 0.0
  %1092 = vmatprep.subr.mxu0 0.0
  %1093 = vmatpush1.msra.mxu0 0.0
  %1094 = vmatprep.subr.mxu0 0.0
  %1095 = vmatpush1.msra.mxu0 0.0
  %1096 = vmatprep.subr.mxu0 0.0
  %1097 = vmatpush1.msra.mxu0 0.0
  %1098 = vmatprep.subr.mxu0 0.0
  %1099 = vmatpush1.msra.mxu0 0.0
  %1100 = vmatprep.subr.mxu0 0.0
  %1101 = vmatpush1.msra.mxu0 0.0
  %1102 = vmatprep.subr.mxu0 0.0
  %1103 = vmatpush1.msra.mxu0 0.0
  %1104 = vmatprep.subr.mxu0 0.0
  %1105 = vmatpush1.msra.mxu0 0.0
  %1106 = vmatprep.subr.mxu0 %v1068
  %1107 = vmatpush1.msra.mxu0 %v1070
  %1108 = vmatprep.subr.mxu0 %v1067
  %1109 = vmatpush1.msra.mxu0 %v1069
  %1110 = vmatprep.subr.mxu0 0.0
  %1111 = vmatpush2.msra.mxu0 0.0
  %1112 = vmatprep.subr.mxu0 0.0
  %1113 = vmatpush2.msra.mxu0 0.0
  %1114 = vmatprep.subr.mxu0 0.0
  %1115 = vmatpush2.msra.mxu0 0.0
  %1116 = vmatprep.subr.mxu0 0.0
  %1117 = vmatpush2.msra.mxu0 0.0
  %1118 = vmatprep.subr.mxu0 0.0
  %1119 = vmatpush2.msra.mxu0 0.0
  %1120 = vmatprep.subr.mxu0 0.0
  %1121 = vmatpush2.msra.mxu0 0.0
  %1122 = vmatprep.subr.mxu0 0.0
  %1123 = vmatpush2.msra.mxu0 0.0
  %1124 = vmatprep.subr.mxu0 0.0
  %1125 = vmatpush2.msra.mxu0 0.0
  %1126 = vmatprep.subr.mxu0 0.0
  %1127 = vmatpush2.msra.mxu0 0.0
  %1128 = vmatprep.subr.mxu0 0.0
  %1129 = vmatpush2.msra.mxu0 0.0
  %1130 = vmatprep.subr.mxu0 0.0
  %1131 = vmatpush2.msra.mxu0 0.0
  %1132 = vmatprep.subr.mxu0 0.0
  %1133 = vmatpush2.msra.mxu0 0.0
  %1134 = vmatprep.subr.mxu0 0.0
  %1135 = vmatpush2.msra.mxu0 0.0
  %1136 = vmatprep.subr.mxu0 0.0
  %1137 = vmatpush2.msra.mxu0 0.0
  %1138 = vmatprep.subr.mxu0 0.0
  %1139 = vmatpush2.msra.mxu0 0.0
  %1140 = vmatprep.subr.mxu0 0.0
  %1141 = vmatpush2.msra.mxu0 0.0
  %1142 = vmatprep.mubr.f32.mxu0 0.0
  %1143 = vmatmul.mubr.f32.gmra.mxu0 %v1076
  %v1144 = vpop.f32.mrf.mxu0
  %v1145 = vadd.f32 0.0, %v1144
  %v1146 = vpop.f32.mrf.mxu0
  %v1147 = vadd.f32 0.0, %v1146
  %1148 = vdwg.mxu0
  %1149 = vmatprep.subr.mxu0 0.0
  %1150 = vmatpush1.msra.mxu0 0.0
  %1151 = vmatprep.subr.mxu0 0.0
  %1152 = vmatpush1.msra.mxu0 0.0
  %1153 = vmatprep.subr.mxu0 0.0
  %1154 = vmatpush1.msra.mxu0 0.0
  %1155 = vmatprep.subr.mxu0 0.0
  %1156 = vmatpush1.msra.mxu0 0.0
  %1157 = vmatprep.subr.mxu0 0.0
  %1158 = vmatpush1.msra.mxu0 0.0
  %1159 = vmatprep.subr.mxu0 0.0
  %1160 = vmatpush1.msra.mxu0 0.0
  %1161 = vmatprep.subr.mxu0 0.0
  %1162 = vmatpush1.msra.mxu0 0.0
  %1163 = vmatprep.subr.mxu0 0.0
  %1164 = vmatpush1.msra.mxu0 0.0
  %1165 = vmatprep.subr.mxu0 0.0
  %1166 = vmatpush1.msra.mxu0 0.0
  %1167 = vmatprep.subr.mxu0 0.0
  %1168 = vmatpush1.msra.mxu0 0.0
  %1169 = vmatprep.subr.mxu0 0.0
  %1170 = vmatpush1.msra.mxu0 0.0
  %1171 = vmatprep.subr.mxu0 0.0
  %1172 = vmatpush1.msra.mxu0 0.0
  %1173 = vmatprep.subr.mxu0 0.0
  %1174 = vmatpush1.msra.mxu0 0.0
  %1175 = vmatprep.subr.mxu0 0.0
  %1176 = vmatpush1.msra.mxu0 0.0
  %1177 = vmatprep.subr.mxu0 %v1072
  %1178 = vmatpush1.msra.mxu0 %v1066
  %1179 = vmatprep.subr.mxu0 %v1071
  %1180 = vmatpush1.msra.mxu0 %v1065
  %1181 = vmatprep.subr.mxu0 0.0
  %1182 = vmatpush2.msra.mxu0 0.0
  %1183 = vmatprep.subr.mxu0 0.0
  %1184 = vmatpush2.msra.mxu0 0.0
  %1185 = vmatprep.subr.mxu0 0.0
  %1186 = vmatpush2.msra.mxu0 0.0
  %1187 = vmatprep.subr.mxu0 0.0
  %1188 = vmatpush2.msra.mxu0 0.0
  %1189 = vmatprep.subr.mxu0 0.0
  %1190 = vmatpush2.msra.mxu0 0.0
  %1191 = vmatprep.subr.mxu0 0.0
  %1192 = vmatpush2.msra.mxu0 0.0
  %1193 = vmatprep.subr.mxu0 0.0
  %1194 = vmatpush2.msra.mxu0 0.0
  %1195 = vmatprep.subr.mxu0 0.0
  %1196 = vmatpush2.msra.mxu0 0.0
  %1197 = vmatprep.subr.mxu0 0.0
  %1198 = vmatpush2.msra.mxu0 0.0
  %1199 = vmatprep.subr.mxu0 0.0
  %1200 = vmatpush2.msra.mxu0 0.0
  %1201 = vmatprep.subr.mxu0 0.0
  %1202 = vmatpush2.msra.mxu0 0.0
  %1203 = vmatprep.subr.mxu0 0.0
  %1204 = vmatpush2.msra.mxu0 0.0
  %1205 = vmatprep.subr.mxu0 0.0
  %1206 = vmatpush2.msra.mxu0 0.0
  %1207 = vmatprep.subr.mxu0 0.0
  %1208 = vmatpush2.msra.mxu0 0.0
  %1209 = vmatprep.subr.mxu0 0.0
  %1210 = vmatpush2.msra.mxu0 0.0
  %1211 = vmatprep.subr.mxu0 0.0
  %1212 = vmatpush2.msra.mxu0 0.0
  %1213 = vmatprep.mubr.f32.mxu0 0.0
  %1214 = vmatmul.mubr.f32.gmra.mxu0 %v1076
  %v1215 = vpop.f32.mrf.mxu0
  %v1216 = vadd.f32 0.0, %v1215
  %v1217 = vpop.f32.mrf.mxu0
  %v1218 = vadd.f32 0.0, %v1217
  %1219 = vdwg.mxu0
  %v1220 = vadd.f32 %v1044, %v1145
  %v1221 = vadd.f32 %v1045, %v1147
  %v1222 = vadd.f32 %v1046, %v1216
  %v1223 = vadd.f32 %v1047, %v1218
  %1224 = vrot.lane.b32.xlu0 %v14, 95
  %v1225 = vpop.permute.xlu0 %1224
  %1226 = vrot.lane.b32.xlu0 %v16, 95
  %v1227 = vpop.permute.xlu0 %1226
  %1228 = vrot.lane.b32.xlu0 %v15, 95
  %v1229 = vpop.permute.xlu0 %1228
  %1230 = vrot.lane.b32.xlu0 %v17, 95
  %v1231 = vpop.permute.xlu0 %1230
  %1232 = vrot.lane.b32.xlu0 %v19, 95
  %v1233 = vpop.permute.xlu0 %1232
  %1234 = vrot.lane.b32.xlu0 %v21, 95
  %v1235 = vpop.permute.xlu0 %1234
  %1236 = vrot.lane.b32.xlu0 %v20, 95
  %v1237 = vpop.permute.xlu0 %1236
  %1238 = vrot.lane.b32.xlu0 %v22, 95
  %v1239 = vpop.permute.xlu0 %1238
  %vm1240 = vcmp.lt.s32.totalorder %v41, 95
  %v1241 = vsel %vm1240, %v1233, %v1237
  %v1242 = vsel %vm1240, %v1235, %v1239
  %v1243 = vsel %vm1240, %v1229, %v1233
  %v1244 = vsel %vm1240, %v1231, %v1235
  %v1245 = vsel %vm1240, %v1225, %v1229
  %v1246 = vsel %vm1240, %v1227, %v1231
  %v1247 = vsel %vm1240, %v1237, %v1225
  %v1248 = vsel %vm1240, %v1239, %v1227
  %s1249 = scalar_lea.vmem %s1, 28
  %v1250 = vld [vmem:[%s1249] sm:$0xf]
  %v1252 = vsel %vm53, %v1250, 0
  %1254 = vmatprep.subr.mxu0 0.0
  %1255 = vmatpush1.msra.mxu0 0.0
  %1256 = vmatprep.subr.mxu0 0.0
  %1257 = vmatpush1.msra.mxu0 0.0
  %1258 = vmatprep.subr.mxu0 0.0
  %1259 = vmatpush1.msra.mxu0 0.0
  %1260 = vmatprep.subr.mxu0 0.0
  %1261 = vmatpush1.msra.mxu0 0.0
  %1262 = vmatprep.subr.mxu0 0.0
  %1263 = vmatpush1.msra.mxu0 0.0
  %1264 = vmatprep.subr.mxu0 0.0
  %1265 = vmatpush1.msra.mxu0 0.0
  %1266 = vmatprep.subr.mxu0 0.0
  %1267 = vmatpush1.msra.mxu0 0.0
  %1268 = vmatprep.subr.mxu0 0.0
  %1269 = vmatpush1.msra.mxu0 0.0
  %1270 = vmatprep.subr.mxu0 0.0
  %1271 = vmatpush1.msra.mxu0 0.0
  %1272 = vmatprep.subr.mxu0 0.0
  %1273 = vmatpush1.msra.mxu0 0.0
  %1274 = vmatprep.subr.mxu0 0.0
  %1275 = vmatpush1.msra.mxu0 0.0
  %1276 = vmatprep.subr.mxu0 0.0
  %1277 = vmatpush1.msra.mxu0 0.0
  %1278 = vmatprep.subr.mxu0 0.0
  %1279 = vmatpush1.msra.mxu0 0.0
  %1280 = vmatprep.subr.mxu0 0.0
  %1281 = vmatpush1.msra.mxu0 0.0
  %1282 = vmatprep.subr.mxu0 %v1244
  %1283 = vmatpush1.msra.mxu0 %v1246
  %1284 = vmatprep.subr.mxu0 %v1243
  %1285 = vmatpush1.msra.mxu0 %v1245
  %1286 = vmatprep.subr.mxu0 0.0
  %1287 = vmatpush2.msra.mxu0 0.0
  %1288 = vmatprep.subr.mxu0 0.0
  %1289 = vmatpush2.msra.mxu0 0.0
  %1290 = vmatprep.subr.mxu0 0.0
  %1291 = vmatpush2.msra.mxu0 0.0
  %1292 = vmatprep.subr.mxu0 0.0
  %1293 = vmatpush2.msra.mxu0 0.0
  %1294 = vmatprep.subr.mxu0 0.0
  %1295 = vmatpush2.msra.mxu0 0.0
  %1296 = vmatprep.subr.mxu0 0.0
  %1297 = vmatpush2.msra.mxu0 0.0
  %1298 = vmatprep.subr.mxu0 0.0
  %1299 = vmatpush2.msra.mxu0 0.0
  %1300 = vmatprep.subr.mxu0 0.0
  %1301 = vmatpush2.msra.mxu0 0.0
  %1302 = vmatprep.subr.mxu0 0.0
  %1303 = vmatpush2.msra.mxu0 0.0
  %1304 = vmatprep.subr.mxu0 0.0
  %1305 = vmatpush2.msra.mxu0 0.0
  %1306 = vmatprep.subr.mxu0 0.0
  %1307 = vmatpush2.msra.mxu0 0.0
  %1308 = vmatprep.subr.mxu0 0.0
  %1309 = vmatpush2.msra.mxu0 0.0
  %1310 = vmatprep.subr.mxu0 0.0
  %1311 = vmatpush2.msra.mxu0 0.0
  %1312 = vmatprep.subr.mxu0 0.0
  %1313 = vmatpush2.msra.mxu0 0.0
  %1314 = vmatprep.subr.mxu0 0.0
  %1315 = vmatpush2.msra.mxu0 0.0
  %1316 = vmatprep.subr.mxu0 0.0
  %1317 = vmatpush2.msra.mxu0 0.0
  %1318 = vmatprep.mubr.f32.mxu0 0.0
  %1319 = vmatmul.mubr.f32.gmra.mxu0 %v1252
  %v1320 = vpop.f32.mrf.mxu0
  %v1321 = vadd.f32 0.0, %v1320
  %v1322 = vpop.f32.mrf.mxu0
  %v1323 = vadd.f32 0.0, %v1322
  %1324 = vdwg.mxu0
  %1325 = vmatprep.subr.mxu0 0.0
  %1326 = vmatpush1.msra.mxu0 0.0
  %1327 = vmatprep.subr.mxu0 0.0
  %1328 = vmatpush1.msra.mxu0 0.0
  %1329 = vmatprep.subr.mxu0 0.0
  %1330 = vmatpush1.msra.mxu0 0.0
  %1331 = vmatprep.subr.mxu0 0.0
  %1332 = vmatpush1.msra.mxu0 0.0
  %1333 = vmatprep.subr.mxu0 0.0
  %1334 = vmatpush1.msra.mxu0 0.0
  %1335 = vmatprep.subr.mxu0 0.0
  %1336 = vmatpush1.msra.mxu0 0.0
  %1337 = vmatprep.subr.mxu0 0.0
  %1338 = vmatpush1.msra.mxu0 0.0
  %1339 = vmatprep.subr.mxu0 0.0
  %1340 = vmatpush1.msra.mxu0 0.0
  %1341 = vmatprep.subr.mxu0 0.0
  %1342 = vmatpush1.msra.mxu0 0.0
  %1343 = vmatprep.subr.mxu0 0.0
  %1344 = vmatpush1.msra.mxu0 0.0
  %1345 = vmatprep.subr.mxu0 0.0
  %1346 = vmatpush1.msra.mxu0 0.0
  %1347 = vmatprep.subr.mxu0 0.0
  %1348 = vmatpush1.msra.mxu0 0.0
  %1349 = vmatprep.subr.mxu0 0.0
  %1350 = vmatpush1.msra.mxu0 0.0
  %1351 = vmatprep.subr.mxu0 0.0
  %1352 = vmatpush1.msra.mxu0 0.0
  %1353 = vmatprep.subr.mxu0 %v1248
  %1354 = vmatpush1.msra.mxu0 %v1242
  %1355 = vmatprep.subr.mxu0 %v1247
  %1356 = vmatpush1.msra.mxu0 %v1241
  %1357 = vmatprep.subr.mxu0 0.0
  %1358 = vmatpush2.msra.mxu0 0.0
  %1359 = vmatprep.subr.mxu0 0.0
  %1360 = vmatpush2.msra.mxu0 0.0
  %1361 = vmatprep.subr.mxu0 0.0
  %1362 = vmatpush2.msra.mxu0 0.0
  %1363 = vmatprep.subr.mxu0 0.0
  %1364 = vmatpush2.msra.mxu0 0.0
  %1365 = vmatprep.subr.mxu0 0.0
  %1366 = vmatpush2.msra.mxu0 0.0
  %1367 = vmatprep.subr.mxu0 0.0
  %1368 = vmatpush2.msra.mxu0 0.0
  %1369 = vmatprep.subr.mxu0 0.0
  %1370 = vmatpush2.msra.mxu0 0.0
  %1371 = vmatprep.subr.mxu0 0.0
  %1372 = vmatpush2.msra.mxu0 0.0
  %1373 = vmatprep.subr.mxu0 0.0
  %1374 = vmatpush2.msra.mxu0 0.0
  %1375 = vmatprep.subr.mxu0 0.0
  %1376 = vmatpush2.msra.mxu0 0.0
  %1377 = vmatprep.subr.mxu0 0.0
  %1378 = vmatpush2.msra.mxu0 0.0
  %1379 = vmatprep.subr.mxu0 0.0
  %1380 = vmatpush2.msra.mxu0 0.0
  %1381 = vmatprep.subr.mxu0 0.0
  %1382 = vmatpush2.msra.mxu0 0.0
  %1383 = vmatprep.subr.mxu0 0.0
  %1384 = vmatpush2.msra.mxu0 0.0
  %1385 = vmatprep.subr.mxu0 0.0
  %1386 = vmatpush2.msra.mxu0 0.0
  %1387 = vmatprep.subr.mxu0 0.0
  %1388 = vmatpush2.msra.mxu0 0.0
  %1389 = vmatprep.mubr.f32.mxu0 0.0
  %1390 = vmatmul.mubr.f32.gmra.mxu0 %v1252
  %v1391 = vpop.f32.mrf.mxu0
  %v1392 = vadd.f32 0.0, %v1391
  %v1393 = vpop.f32.mrf.mxu0
  %v1394 = vadd.f32 0.0, %v1393
  %1395 = vdwg.mxu0
  %v1396 = vadd.f32 %v1220, %v1321
  %v1397 = vadd.f32 %v1221, %v1323
  %v1398 = vadd.f32 %v1222, %v1392
  %v1399 = vadd.f32 %v1223, %v1394
  %1400 = vrot.lane.b32.xlu0 %v14, 94
  %v1401 = vpop.permute.xlu0 %1400
  %1402 = vrot.lane.b32.xlu0 %v16, 94
  %v1403 = vpop.permute.xlu0 %1402
  %1404 = vrot.lane.b32.xlu0 %v15, 94
  %v1405 = vpop.permute.xlu0 %1404
  %1406 = vrot.lane.b32.xlu0 %v17, 94
  %v1407 = vpop.permute.xlu0 %1406
  %1408 = vrot.lane.b32.xlu0 %v19, 94
  %v1409 = vpop.permute.xlu0 %1408
  %1410 = vrot.lane.b32.xlu0 %v21, 94
  %v1411 = vpop.permute.xlu0 %1410
  %1412 = vrot.lane.b32.xlu0 %v20, 94
  %v1413 = vpop.permute.xlu0 %1412
  %1414 = vrot.lane.b32.xlu0 %v22, 94
  %v1415 = vpop.permute.xlu0 %1414
  %vm1416 = vcmp.lt.s32.totalorder %v41, 94
  %v1417 = vsel %vm1416, %v1409, %v1413
  %v1418 = vsel %vm1416, %v1411, %v1415
  %v1419 = vsel %vm1416, %v1405, %v1409
  %v1420 = vsel %vm1416, %v1407, %v1411
  %v1421 = vsel %vm1416, %v1401, %v1405
  %v1422 = vsel %vm1416, %v1403, %v1407
  %v1423 = vsel %vm1416, %v1413, %v1401
  %v1424 = vsel %vm1416, %v1415, %v1403
  %s1425 = scalar_lea.vmem %s1, 32
  %v1426 = vld [vmem:[%s1425] sm:$0xf]
  %v1428 = vsel %vm53, %v1426, 0
  %1430 = vmatprep.subr.mxu0 0.0
  %1431 = vmatpush1.msra.mxu0 0.0
  %1432 = vmatprep.subr.mxu0 0.0
  %1433 = vmatpush1.msra.mxu0 0.0
  %1434 = vmatprep.subr.mxu0 0.0
  %1435 = vmatpush1.msra.mxu0 0.0
  %1436 = vmatprep.subr.mxu0 0.0
  %1437 = vmatpush1.msra.mxu0 0.0
  %1438 = vmatprep.subr.mxu0 0.0
  %1439 = vmatpush1.msra.mxu0 0.0
  %1440 = vmatprep.subr.mxu0 0.0
  %1441 = vmatpush1.msra.mxu0 0.0
  %1442 = vmatprep.subr.mxu0 0.0
  %1443 = vmatpush1.msra.mxu0 0.0
  %1444 = vmatprep.subr.mxu0 0.0
  %1445 = vmatpush1.msra.mxu0 0.0
  %1446 = vmatprep.subr.mxu0 0.0
  %1447 = vmatpush1.msra.mxu0 0.0
  %1448 = vmatprep.subr.mxu0 0.0
  %1449 = vmatpush1.msra.mxu0 0.0
  %1450 = vmatprep.subr.mxu0 0.0
  %1451 = vmatpush1.msra.mxu0 0.0
  %1452 = vmatprep.subr.mxu0 0.0
  %1453 = vmatpush1.msra.mxu0 0.0
  %1454 = vmatprep.subr.mxu0 0.0
  %1455 = vmatpush1.msra.mxu0 0.0
  %1456 = vmatprep.subr.mxu0 0.0
  %1457 = vmatpush1.msra.mxu0 0.0
  %1458 = vmatprep.subr.mxu0 %v1420
  %1459 = vmatpush1.msra.mxu0 %v1422
  %1460 = vmatprep.subr.mxu0 %v1419
  %1461 = vmatpush1.msra.mxu0 %v1421
  %1462 = vmatprep.subr.mxu0 0.0
  %1463 = vmatpush2.msra.mxu0 0.0
  %1464 = vmatprep.subr.mxu0 0.0
  %1465 = vmatpush2.msra.mxu0 0.0
  %1466 = vmatprep.subr.mxu0 0.0
  %1467 = vmatpush2.msra.mxu0 0.0
  %1468 = vmatprep.subr.mxu0 0.0
  %1469 = vmatpush2.msra.mxu0 0.0
  %1470 = vmatprep.subr.mxu0 0.0
  %1471 = vmatpush2.msra.mxu0 0.0
  %1472 = vmatprep.subr.mxu0 0.0
  %1473 = vmatpush2.msra.mxu0 0.0
  %1474 = vmatprep.subr.mxu0 0.0
  %1475 = vmatpush2.msra.mxu0 0.0
  %1476 = vmatprep.subr.mxu0 0.0
  %1477 = vmatpush2.msra.mxu0 0.0
  %1478 = vmatprep.subr.mxu0 0.0
  %1479 = vmatpush2.msra.mxu0 0.0
  %1480 = vmatprep.subr.mxu0 0.0
  %1481 = vmatpush2.msra.mxu0 0.0
  %1482 = vmatprep.subr.mxu0 0.0
  %1483 = vmatpush2.msra.mxu0 0.0
  %1484 = vmatprep.subr.mxu0 0.0
  %1485 = vmatpush2.msra.mxu0 0.0
  %1486 = vmatprep.subr.mxu0 0.0
  %1487 = vmatpush2.msra.mxu0 0.0
  %1488 = vmatprep.subr.mxu0 0.0
  %1489 = vmatpush2.msra.mxu0 0.0
  %1490 = vmatprep.subr.mxu0 0.0
  %1491 = vmatpush2.msra.mxu0 0.0
  %1492 = vmatprep.subr.mxu0 0.0
  %1493 = vmatpush2.msra.mxu0 0.0
  %1494 = vmatprep.mubr.f32.mxu0 0.0
  %1495 = vmatmul.mubr.f32.gmra.mxu0 %v1428
  %v1496 = vpop.f32.mrf.mxu0
  %v1497 = vadd.f32 0.0, %v1496
  %v1498 = vpop.f32.mrf.mxu0
  %v1499 = vadd.f32 0.0, %v1498
  %1500 = vdwg.mxu0
  %1501 = vmatprep.subr.mxu0 0.0
  %1502 = vmatpush1.msra.mxu0 0.0
  %1503 = vmatprep.subr.mxu0 0.0
  %1504 = vmatpush1.msra.mxu0 0.0
  %1505 = vmatprep.subr.mxu0 0.0
  %1506 = vmatpush1.msra.mxu0 0.0
  %1507 = vmatprep.subr.mxu0 0.0
  %1508 = vmatpush1.msra.mxu0 0.0
  %1509 = vmatprep.subr.mxu0 0.0
  %1510 = vmatpush1.msra.mxu0 0.0
  %1511 = vmatprep.subr.mxu0 0.0
  %1512 = vmatpush1.msra.mxu0 0.0
  %1513 = vmatprep.subr.mxu0 0.0
  %1514 = vmatpush1.msra.mxu0 0.0
  %1515 = vmatprep.subr.mxu0 0.0
  %1516 = vmatpush1.msra.mxu0 0.0
  %1517 = vmatprep.subr.mxu0 0.0
  %1518 = vmatpush1.msra.mxu0 0.0
  %1519 = vmatprep.subr.mxu0 0.0
  %1520 = vmatpush1.msra.mxu0 0.0
  %1521 = vmatprep.subr.mxu0 0.0
  %1522 = vmatpush1.msra.mxu0 0.0
  %1523 = vmatprep.subr.mxu0 0.0
  %1524 = vmatpush1.msra.mxu0 0.0
  %1525 = vmatprep.subr.mxu0 0.0
  %1526 = vmatpush1.msra.mxu0 0.0
  %1527 = vmatprep.subr.mxu0 0.0
  %1528 = vmatpush1.msra.mxu0 0.0
  %1529 = vmatprep.subr.mxu0 %v1424
  %1530 = vmatpush1.msra.mxu0 %v1418
  %1531 = vmatprep.subr.mxu0 %v1423
  %1532 = vmatpush1.msra.mxu0 %v1417
  %1533 = vmatprep.subr.mxu0 0.0
  %1534 = vmatpush2.msra.mxu0 0.0
  %1535 = vmatprep.subr.mxu0 0.0
  %1536 = vmatpush2.msra.mxu0 0.0
  %1537 = vmatprep.subr.mxu0 0.0
  %1538 = vmatpush2.msra.mxu0 0.0
  %1539 = vmatprep.subr.mxu0 0.0
  %1540 = vmatpush2.msra.mxu0 0.0
  %1541 = vmatprep.subr.mxu0 0.0
  %1542 = vmatpush2.msra.mxu0 0.0
  %1543 = vmatprep.subr.mxu0 0.0
  %1544 = vmatpush2.msra.mxu0 0.0
  %1545 = vmatprep.subr.mxu0 0.0
  %1546 = vmatpush2.msra.mxu0 0.0
  %1547 = vmatprep.subr.mxu0 0.0
  %1548 = vmatpush2.msra.mxu0 0.0
  %1549 = vmatprep.subr.mxu0 0.0
  %1550 = vmatpush2.msra.mxu0 0.0
  %1551 = vmatprep.subr.mxu0 0.0
  %1552 = vmatpush2.msra.mxu0 0.0
  %1553 = vmatprep.subr.mxu0 0.0
  %1554 = vmatpush2.msra.mxu0 0.0
  %1555 = vmatprep.subr.mxu0 0.0
  %1556 = vmatpush2.msra.mxu0 0.0
  %1557 = vmatprep.subr.mxu0 0.0
  %1558 = vmatpush2.msra.mxu0 0.0
  %1559 = vmatprep.subr.mxu0 0.0
  %1560 = vmatpush2.msra.mxu0 0.0
  %1561 = vmatprep.subr.mxu0 0.0
  %1562 = vmatpush2.msra.mxu0 0.0
  %1563 = vmatprep.subr.mxu0 0.0
  %1564 = vmatpush2.msra.mxu0 0.0
  %1565 = vmatprep.mubr.f32.mxu0 0.0
  %1566 = vmatmul.mubr.f32.gmra.mxu0 %v1428
  %v1567 = vpop.f32.mrf.mxu0
  %v1568 = vadd.f32 0.0, %v1567
  %v1569 = vpop.f32.mrf.mxu0
  %v1570 = vadd.f32 0.0, %v1569
  %1571 = vdwg.mxu0
  %v1572 = vadd.f32 %v1396, %v1497
  %v1573 = vadd.f32 %v1397, %v1499
  %v1574 = vadd.f32 %v1398, %v1568
  %v1575 = vadd.f32 %v1399, %v1570
  %v1576 = vld [vmem:[%s2] sm:$0xf]
  %1578 = vset.pattern.permute.xlu0 0
  %1579 = vperm.xlu0 %1578, %v1576
  %v1580 = vpop.permute.xlu0 %1579
  %v1582 = vadd.f32 %v1572, %v1580
  %v1583 = vadd.f32 %v1573, %v1580
  %v1584 = vadd.f32 %v1574, %v1580
  %v1585 = vadd.f32 %v1575, %v1580
  %vm1586 = vcmask 1043456
  %v1587 = vsel %vm1586, %v1582, -inf
  %v1588 = vrot.slane %v1587, 4
  %v1589 = vmax.f32 %v1587, %v1588
  %v1590 = vrot.slane %v1589, 2
  %v1591 = vmax.f32 %v1589, %v1590
  %v1592 = vrot.slane %v1591, 1
  %v1593 = vmax.f32 %v1591, %v1592
  %v1594 = vsel %vm1586, %v1583, -inf
  %v1595 = vrot.slane %v1594, 4
  %v1596 = vmax.f32 %v1594, %v1595
  %v1597 = vrot.slane %v1596, 2
  %v1598 = vmax.f32 %v1596, %v1597
  %v1599 = vrot.slane %v1598, 1
  %v1600 = vmax.f32 %v1598, %v1599
  %v1601 = vsel %vm1586, %v1584, -inf
  %v1602 = vrot.slane %v1601, 4
  %v1603 = vmax.f32 %v1601, %v1602
  %v1604 = vrot.slane %v1603, 2
  %v1605 = vmax.f32 %v1603, %v1604
  %v1606 = vrot.slane %v1605, 1
  %v1607 = vmax.f32 %v1605, %v1606
  %v1608 = vsel %vm1586, %v1585, -inf
  %v1609 = vrot.slane %v1608, 4
  %v1610 = vmax.f32 %v1608, %v1609
  %v1611 = vrot.slane %v1610, 2
  %v1612 = vmax.f32 %v1610, %v1611
  %v1613 = vrot.slane %v1612, 1
  %v1614 = vmax.f32 %v1612, %v1613
  %v1615 = vsub.f32 %v1582, %v1593
  %v1616 = vsub.f32 %v1583, %v1600
  %v1617 = vsub.f32 %v1584, %v1607
  %v1618 = vsub.f32 %v1585, %v1614
  %v1619 = vmul.f32 %v1615, 1.442695
  %v1620 = vpow.pop %v1619
  %v1621 = vmul.f32 %v1616, 1.442695
  %v1622 = vpow.pop %v1621
  %v1623 = vmul.f32 %v1617, 1.442695
  %v1624 = vpow.pop %v1623
  %v1625 = vmul.f32 %v1618, 1.442695
  %v1626 = vpow.pop %v1625
  %v1627 = vsel %vm1586, %v1620, 0.0
  %v1628 = vrot.slane %v1627, 4
  %v1629 = vadd.f32 %v1627, %v1628
  %v1630 = vrot.slane %v1629, 2
  %v1631 = vadd.f32 %v1629, %v1630
  %v1632 = vrot.slane %v1631, 1
  %v1633 = vadd.f32 %v1631, %v1632
  %v1634 = vsel %vm1586, %v1622, 0.0
  %v1635 = vrot.slane %v1634, 4
  %v1636 = vadd.f32 %v1634, %v1635
  %v1637 = vrot.slane %v1636, 2
  %v1638 = vadd.f32 %v1636, %v1637
  %v1639 = vrot.slane %v1638, 1
  %v1640 = vadd.f32 %v1638, %v1639
  %v1641 = vsel %vm1586, %v1624, 0.0
  %v1642 = vrot.slane %v1641, 4
  %v1643 = vadd.f32 %v1641, %v1642
  %v1644 = vrot.slane %v1643, 2
  %v1645 = vadd.f32 %v1643, %v1644
  %v1646 = vrot.slane %v1645, 1
  %v1647 = vadd.f32 %v1645, %v1646
  %v1648 = vsel %vm1586, %v1626, 0.0
  %v1649 = vrot.slane %v1648, 4
  %v1650 = vadd.f32 %v1648, %v1649
  %v1651 = vrot.slane %v1650, 2
  %v1652 = vadd.f32 %v1650, %v1651
  %v1653 = vrot.slane %v1652, 1
  %v1654 = vadd.f32 %v1652, %v1653
  %v1655 = vlog2.pop %v1633
  %v1656 = vmul.f32 %v1655, 0.6931472
  %v1657 = vlog2.pop %v1640
  %v1658 = vmul.f32 %v1657, 0.6931472
  %v1659 = vlog2.pop %v1647
  %v1660 = vmul.f32 %v1659, 0.6931472
  %v1661 = vlog2.pop %v1654
  %v1662 = vmul.f32 %v1661, 0.6931472
  %v1663 = vsub.f32 %v1615, %v1656
  %v1664 = vsub.f32 %v1616, %v1658
  %v1665 = vsub.f32 %v1617, %v1660
  %v1666 = vsub.f32 %v1618, %v1662
  %v1669 = vcombine.low %v1663, %v1664
  %1671 = vst [vmem:[%s3] sm:$0xff] %v1669
  %v1674 = vcombine.low %v1665, %v1666
  %s1676 = scalar_lea.vmem %s3, 8
  %1677 = vst [vmem:[%s1676] sm:$0xff] %v1674
  // Predicated region
  $region14: #{net_forward.1} parent=0 // pred_check
    _
  $region15: #{net_forward.1} parent=0 // pred_check_branch
    %1679 = sbr.rel (0) target = $region17
  $region16: #{net_forward.1} parent=0 // pred_region
    _
  $region17: #{net_forward.1} parent=0 // pred_fallthru
    _
  // Predicated region
  $region18: #{net_forward.1} parent=0 // pred_check
    _
  $region19: #{net_forward.1} parent=0 // pred_check_branch
    %1681 = sbr.rel (0) target = $region21
  $region20: #{net_forward.1} parent=0 // pred_region
    _
  $region21: #{net_forward.1} parent=0 // pred_fallthru
    _

</llo_original>
